<compile_context>
chip_gen: v5e
topology: v5e:2x2
jax: 0.10.0
libtpu: 0.0.40
codegen_flags: <defaults>
</compile_context>

<pallas_src>
import functools

import jax
import jax.numpy as jnp
from jax.experimental import pallas as pl
from jax.experimental.pallas import tpu as pltpu

_VMEM_LIMIT = 64 * 1024 * 1024  # sized for the v7x 64 MiB budget; blocks are far smaller
_HIGH = jax.lax.Precision.HIGHEST


# ---------------------------------------------------------------------------
# helpers
# ---------------------------------------------------------------------------
def _round_up(x, m):
    return (x + m - 1) // m * m


def _tile(n):
    """Legal TPU tile for an axis of length n (full extent when small / non-divisible)."""
    return n if (n <= 256 or n % 128 != 0) else 128


def _layer_norm(x, gamma, beta, eps=1e-5):
    mu = jnp.mean(x, axis=-1, keepdims=True)
    xc = x - mu
    var = jnp.mean(xc * xc, axis=-1, keepdims=True)
    return xc * jax.lax.rsqrt(var + eps) * gamma + beta


# ---------------------------------------------------------------------------
# Transition (LayerNorm + SwiGLU MLP + residual), used for msa_ and z_transition
# ---------------------------------------------------------------------------
def _transition_kernel(x_ref, g_ref, b_ref, w1_ref, w2_ref, w3_ref, o_ref):
    x = x_ref[...]                                   # (tr, D)
    mu = jnp.mean(x, axis=-1, keepdims=True)
    xc = x - mu
    var = jnp.mean(xc * xc, axis=-1, keepdims=True)
    ln = xc * jax.lax.rsqrt(var + 1e-5) * g_ref[...] + b_ref[...]
    h1 = jnp.dot(ln, w1_ref[...], preferred_element_type=jnp.float32)
    h2 = jnp.dot(ln, w2_ref[...], preferred_element_type=jnp.float32)
    h = jax.nn.silu(h1) * h2
    o_ref[...] = (x + jnp.dot(h, w3_ref[...],
                              preferred_element_type=jnp.float32)).astype(o_ref.dtype)


def _transition(x, p, use_pallas):
    """x -> x + fc3(silu(fc1(ln(x))) * fc2(ln(x)))  (residual fused)."""
    if not use_pallas:
        ln = _layer_norm(x, p["ln_g"], p["ln_b"])
        h = jax.nn.silu(jnp.dot(ln, p["w1"], precision=_HIGH)) * \
            jnp.dot(ln, p["w2"], precision=_HIGH)
        return x + jnp.dot(h, p["w3"], precision=_HIGH)

    D = x.shape[-1]
    lead = x.shape[:-1]
    xf = x.reshape(-1, D)
    R = xf.shape[0]
    Rp = _round_up(R, 8)
    tr = min(256, Rp)
    Rp = _round_up(Rp, tr)
    if Rp != R:
        xf = jnp.pad(xf, ((0, Rp - R), (0, 0)))      # tail tiles instead of asserting

    out = pl.pallas_call(
        _transition_kernel,
        out_shape=jax.ShapeDtypeStruct((Rp, D), x.dtype),
        grid_spec=pltpu.PrefetchScalarGridSpec(
            num_scalar_prefetch=0,
            grid=(Rp // tr,),
            in_specs=[
                pl.BlockSpec((tr, D), lambda r: (r, 0)),
                pl.BlockSpec((1, D), lambda r: (0, 0)),
                pl.BlockSpec((1, D), lambda r: (0, 0)),
                pl.BlockSpec(p["w1"].shape, lambda r: (0, 0)),
                pl.BlockSpec(p["w2"].shape, lambda r: (0, 0)),
                pl.BlockSpec(p["w3"].shape, lambda r: (0, 0)),
            ],
            out_specs=pl.BlockSpec((tr, D), lambda r: (r, 0)),
        ),
        compiler_params=pltpu.CompilerParams(
            dimension_semantics=("parallel",), vmem_limit_bytes=_VMEM_LIMIT),
    )(xf, p["ln_g"].reshape(1, D), p["ln_b"].reshape(1, D), p["w1"], p["w2"], p["w3"])
    return out[:R].reshape(*lead, D)


# ---------------------------------------------------------------------------
# Triangle multiplication (outgoing / incoming) core: einsum('bcik,bcjk->bcij')
# ---------------------------------------------------------------------------
def _tri_mul_core_kernel(a_ref, b_ref, o_ref, acc_ref):
    @pl.when(pl.program_id(3) == 0)
    def _():
        acc_ref[...] = jnp.zeros_like(acc_ref)

    acc_ref[...] += jax.lax.dot_general(
        a_ref[0], b_ref[0],
        dimension_numbers=(((2,), (2,)), ((0,), (0,))),   # contract k, batch over C
        preferred_element_type=jnp.float32)

    @pl.when(pl.program_id(3) == pl.num_programs(3) - 1)
    def _():
        o_ref[0] = acc_ref[...].astype(o_ref.dtype)


def _tri_mul_core_pallas(a, b):
    B, C, L, _ = a.shape
    t = _tile(L)
    n = L // t
    return pl.pallas_call(
        _tri_mul_core_kernel,
        out_shape=jax.ShapeDtypeStruct((B, C, L, L), a.dtype),
        grid_spec=pltpu.PrefetchScalarGridSpec(
            num_scalar_prefetch=0,
            grid=(B, n, n, n),
            in_specs=[
                pl.BlockSpec((1, C, t, t), lambda bb, i, j, k: (bb, 0, i, k)),
                pl.BlockSpec((1, C, t, t), lambda bb, i, j, k: (bb, 0, j, k)),
            ],
            out_specs=pl.BlockSpec((1, C, t, t), lambda bb, i, j, k: (bb, 0, i, j)),
            scratch_shapes=[pltpu.VMEM((C, t, t), jnp.float32)],
        ),
        compiler_params=pltpu.CompilerParams(
            dimension_semantics=("parallel", "parallel", "parallel", "arbitrary"),
            vmem_limit_bytes=_VMEM_LIMIT),
    )(a, b)


def _triangle_mult(z, pair_mask, p, *, incoming, use_pallas):
    B, L, _, C = z.shape
    x = _layer_norm(z, p["ln_in_g"], p["ln_in_b"])            # (B, L, L, C)

    # Project straight into the channel-major layout the MXU kernel wants.  For the
    # incoming variant, request the (i,k)-swapped plane from the projection einsum
    # itself (swapped-index trick from the perf review) so no standalone transpose of a
    # z-sized array is ever materialized.
    eq = "bikc,cd->bdki" if incoming else "bikc,cd->bdik"
    pin = jnp.einsum(eq, x, p["w_p_in"])                      # (B, 2C, L, L)
    gin = jax.nn.sigmoid(jnp.einsum(eq, x, p["w_g_in"]))
    msk = jnp.swapaxes(pair_mask, 1, 2) if incoming else pair_mask
    ab = pin * gin * msk[:, None, :, :]
    a, b = ab[:, :C], ab[:, C:]

    if use_pallas:
        core = _tri_mul_core_pallas(a, b)                     # (B, C, L, L)
    else:
        core = jnp.einsum("bcik,bcjk->bcij", a, b, precision=_HIGH)

    core = jnp.moveaxis(core, 1, -1)                          # back to channels-last
    core = _layer_norm(core, p["ln_out_g"], p["ln_out_b"])
    return (core @ p["w_p_out"]) * jax.nn.sigmoid(x @ p["w_g_out"])


# ---------------------------------------------------------------------------
# Triangle attention (starting / ending node) core
# ---------------------------------------------------------------------------
def _tri_attn_kernel(q_ref, k_ref, v_ref, b_ref, m_ref, o_ref, *, scale, inf):
    q = q_ref[0]                                              # (ti, L, D)
    k = k_ref[0]
    logits = jax.lax.dot_general(
        q, k, dimension_numbers=(((2,), (2,)), ((0,), (0,))),
        preferred_element_type=jnp.float32) * scale           # (ti, Lq, Lk)
    logits = logits + b_ref[0][None, :, :]                    # triangle bias b[j_q, j_k]
    logits = logits + (inf * (m_ref[0] - 1.0))[:, None, :]    # key mask per row i
    mx = jnp.max(logits, axis=-1, keepdims=True)
    e = jnp.exp(logits - mx)
    s = jnp.sum(e, axis=-1, keepdims=True)
    o = jax.lax.dot_general(
        e, v_ref[0], dimension_numbers=(((2,), (1,)), ((0,), (0,))),
        preferred_element_type=jnp.float32)
    o_ref[0] = (o / s).astype(o_ref.dtype)


def _attn_core_pallas(q, k, v, bias, mask, *, scale, inf, num_heads):
    BH, L, _, Dh = q.shape
    t = _tile(L)
    n = L // t
    H = num_heads
    kern = functools.partial(_tri_attn_kernel, scale=scale, inf=inf)
    # TODO(synk): for long L, tile the key axis flash-style instead of keeping a full
    # (t, L, L) logits block in VMEM.
    return pl.pallas_call(
        kern,
        out_shape=jax.ShapeDtypeStruct((BH, L, L, Dh), q.dtype),
        grid_spec=pltpu.PrefetchScalarGridSpec(
            num_scalar_prefetch=0,
            grid=(BH, n),
            in_specs=[
                pl.BlockSpec((1, t, L, Dh), lambda h, i: (h, i, 0, 0)),
                pl.BlockSpec((1, t, L, Dh), lambda h, i: (h, i, 0, 0)),
                pl.BlockSpec((1, t, L, Dh), lambda h, i: (h, i, 0, 0)),
                pl.BlockSpec((1, L, L), lambda h, i: (h, 0, 0)),
                pl.BlockSpec((1, t, L), lambda h, i: (h // H, i, 0)),
            ],
            out_specs=pl.BlockSpec((1, t, L, Dh), lambda h, i: (h, i, 0, 0)),
        ),
        compiler_params=pltpu.CompilerParams(
            dimension_semantics=("parallel", "parallel"),
            vmem_limit_bytes=_VMEM_LIMIT),
    )(q, k, v, bias, mask)


def _attn_core_ref(q, k, v, bias, mask, *, scale, inf, num_heads):
    mb = inf * (mask - 1.0)
    mb = jnp.repeat(mb, num_heads, axis=0)                    # (BH, L, L)
    logits = jnp.einsum("xijd,xikd->xijk", q, k, precision=_HIGH) * scale
    logits = logits + bias[:, None, :, :] + mb[:, :, None, :]
    p = jax.nn.softmax(logits, axis=-1)
    return jnp.einsum("xijk,xikd->xijd", p, v, precision=_HIGH)


def _triangle_attention(z, pair_mask, p, *, ending, use_pallas, inf=1e9):
    B, L, _, C = z.shape
    H, Dh = p["heads"], p["head_dim"]

    if ending:
        # Ending node == starting-node attention on z^T (with its own weights), result
        # transposed back (mirrors the PyTorch module).
        # TODO(synk): fold these two swapaxes into swapped BlockSpec index_maps plus a
        # small in-kernel tile transpose to save the HBM round trip.
        z_in = jnp.swapaxes(z, 1, 2)
        msk = jnp.swapaxes(pair_mask, 1, 2)
    else:
        z_in, msk = z, pair_mask

    x = _layer_norm(z_in, p["ln_g"], p["ln_b"])               # (B, L, L, C)
    wq = p["wq"].reshape(C, H, Dh)
    wk = p["wk"].reshape(C, H, Dh)
    wv = p["wv"].reshape(C, H, Dh)
    wg = p["wg"].reshape(C, H, Dh)
    q = jnp.einsum("bijc,chd->bhijd", x, wq).reshape(B * H, L, L, Dh)
    k = jnp.einsum("bijc,chd->bhijd", x, wk).reshape(B * H, L, L, Dh)
    v = jnp.einsum("bijc,chd->bhijd", x, wv).reshape(B * H, L, L, Dh)
    bias = jnp.einsum("bijc,ch->bhij", x, p["wb"]).reshape(B * H, L, L)

    core = _attn_core_pallas if use_pallas else _attn_core_ref
    o = core(q, k, v, bias, msk, scale=1.0 / (Dh ** 0.5), inf=inf, num_heads=H)
    o = o.reshape(B, H, L, L, Dh)

    g = jax.nn.sigmoid(jnp.einsum("bijc,chd->bhijd", x, wg))
    out = jnp.einsum("bhijd,hdc->bijc", g * o, p["wo"].reshape(H, Dh, C))
    if ending:
        out = jnp.swapaxes(out, 1, 2)
    return out


# ---------------------------------------------------------------------------
# PairWeightedAveraging & OuterProductMean (XLA glue for now)
# ---------------------------------------------------------------------------
def _pair_weighted_averaging(m, z, token_mask, p, inf=1e6):
    # TODO(synk): move the softmax + weighted-average combine into a Pallas kernel with
    # an (S, H)-aware, lane-dense layout; left to XLA here.
    B, S, L, _ = m.shape
    H, ch = p["heads"], p["c_h"]
    mn = _layer_norm(m, p["ln_m_g"], p["ln_m_b"])
    zn = _layer_norm(z, p["ln_z_g"], p["ln_z_b"])
    v = (mn @ p["w_v"]).reshape(B, S, L, H, ch)
    logits = jnp.einsum("bijc,ch->bhij", zn, p["w_z"])
    logits = logits + (1.0 - token_mask)[:, None, :, :] * (-inf)
    w = jax.nn.softmax(logits, axis=-1)
    g = jax.nn.sigmoid(mn @ p["w_g"])
    o = jnp.einsum("bhij,bsjhd->bsihd", w, v).reshape(B, S, L, H * ch)
    return (g * o) @ p["w_o"]


def _outer_product_mean(m, msa_mask, p, eps=1e-3):
    # TODO(synk): tile over (i, j) with an S-accumulating Pallas kernel for large MSAs.
    B, S, L, _ = m.shape
    ch = p["c_hidden"]
    mn = _layer_norm(m, p["ln_g"], p["ln_b"])
    msk = msa_mask.astype(mn.dtype)
    a = (mn @ p["w_a"]) * msk[..., None]
    b = (mn @ p["w_b"]) * msk[..., None]
    outer = jnp.einsum("bsic,bsjd->bijcd", a, b).reshape(B, L, L, ch * ch)
    num = jnp.einsum("bsi,bsj->bij", msk, msk)[..., None]
    return (outer @ p["w_o"] + p["b_o"]) / (num + eps)


# ---------------------------------------------------------------------------
# Full MSALayer forward (inference: dropout masks are 1.0 and omitted)
# ---------------------------------------------------------------------------
def msa_layer_forward(params, z, m, token_mask, msa_mask, *, use_pallas=True):
    m = m + _pair_weighted_averaging(m, z, token_mask, params["pwa"])
    m = _transition(m, params["msa_transition"], use_pallas)
    z = z + _outer_product_mean(m, msa_mask, params["opm"])
    z = z + _triangle_mult(z, token_mask, params["tri_mul_out"],
                           incoming=False, use_pallas=use_pallas)
    z = z + _triangle_mult(z, token_mask, params["tri_mul_in"],
                           incoming=True, use_pallas=use_pallas)
    z = z + _triangle_attention(z, token_mask, params["tri_att_start"],
                                ending=False, use_pallas=use_pallas)
    z = z + _triangle_attention(z, token_mask, params["tri_att_end"],
                                ending=True, use_pallas=use_pallas)
    z = _transition(z, params["z_transition"], use_pallas)
    return z, m


# ---------------------------------------------------------------------------
# deterministic parameter construction
# ---------------------------------------------------------------------------
def init_params(key, msa_s, token_z, *, pwa_heads=8, pwa_ch=32, opm_hidden=32,
                tri_heads=4, tri_head_dim=32):
    ks = iter(jax.random.split(key, 64))

    def lin(din, dout):
        return jax.random.normal(next(ks), (din, dout), jnp.float32) / jnp.sqrt(1.0 * din)

    def ln(d):
        return (1.0 + 0.1 * jax.random.normal(next(ks), (d,), jnp.float32),
                0.1 * jax.random.normal(next(ks), (d,), jnp.float32))

    p = {}
    gm, bm = ln(msa_s)
    gz, bz = ln(token_z)
    p["pwa"] = dict(heads=pwa_heads, c_h=pwa_ch, ln_m_g=gm, ln_m_b=bm, ln_z_g=gz,
                    ln_z_b=bz, w_v=lin(msa_s, pwa_heads * pwa_ch),
                    w_g=lin(msa_s, pwa_heads * pwa_ch), w_z=lin(token_z, pwa_heads),
                    w_o=lin(pwa_heads * pwa_ch, msa_s))
    g, b = ln(msa_s)
    p["msa_transition"] = dict(ln_g=g, ln_b=b, w1=lin(msa_s, 4 * msa_s),
                               w2=lin(msa_s, 4 * msa_s), w3=lin(4 * msa_s, msa_s))
    g, b = ln(msa_s)
    p["opm"] = dict(c_hidden=opm_hidden, ln_g=g, ln_b=b, w_a=lin(msa_s, opm_hidden),
                    w_b=lin(msa_s, opm_hidden), w_o=lin(opm_hidden * opm_hidden, token_z),
                    b_o=0.1 * jax.random.normal(next(ks), (token_z,), jnp.float32))
    for name in ("tri_mul_out", "tri_mul_in"):
        g1, b1 = ln(token_z)
        g2, b2 = ln(token_z)
        p[name] = dict(ln_in_g=g1, ln_in_b=b1, ln_out_g=g2, ln_out_b=b2,
                       w_p_in=lin(token_z, 2 * token_z), w_g_in=lin(token_z, 2 * token_z),
                       w_p_out=lin(token_z, token_z), w_g_out=lin(token_z, token_z))
    for name in ("tri_att_start", "tri_att_end"):
        g1, b1 = ln(token_z)
        p[name] = dict(heads=tri_heads, head_dim=tri_head_dim, ln_g=g1, ln_b=b1,
                       wq=lin(token_z, tri_heads * tri_head_dim),
                       wk=lin(token_z, tri_heads * tri_head_dim),
                       wv=lin(token_z, tri_heads * tri_head_dim),
                       wg=lin(token_z, tri_heads * tri_head_dim),
                       wb=lin(token_z, tri_heads),
                       wo=lin(tri_heads * tri_head_dim, token_z))
    g, b = ln(token_z)
    p["z_transition"] = dict(ln_g=g, ln_b=b, w1=lin(token_z, 4 * token_z),
                             w2=lin(token_z, 4 * token_z), w3=lin(4 * token_z, token_z))
    return p


if __name__ == "__main__":
    B, S, L = 2, 4, 16
    msa_s, token_z = 64, 32

    key = jax.random.PRNGKey(0)
    kp, kz, km = jax.random.split(key, 3)
    params = init_params(kp, msa_s, token_z)
    z = jax.random.normal(kz, (B, L, L, token_z), jnp.float32)
    m = jax.random.normal(km, (B, S, L, msa_s), jnp.float32)

    tok = (jnp.arange(L) < L - 3).astype(jnp.float32)
    token_mask = jnp.broadcast_to(tok[None, :, None] * tok[None, None, :], (B, L, L))
    msa_mask = jnp.broadcast_to(
        ((jnp.arange(S) < S - 1)[:, None] & (jnp.arange(L) < L - 3)[None, :]
         ).astype(jnp.int32), (B, S, L))

    z_out, m_out = msa_layer_forward(params, z, m, token_mask, msa_mask, use_pallas=True)
    z_out, m_out = jax.block_until_ready((z_out, m_out))

    z_ref, m_ref = msa_layer_forward(params, z, m, token_mask, msa_mask, use_pallas=False)
    z_ref, m_ref = jax.block_until_ready((z_ref, m_ref))

    assert z_out.shape == (B, L, L, token_z), z_out.shape
    assert m_out.shape == (B, S, L, msa_s), m_out.shape
    assert jnp.allclose(m_out, m_ref, atol=5e-3, rtol=5e-3), \
        float(jnp.max(jnp.abs(m_out - m_ref)))
    assert jnp.allclose(z_out, z_ref, atol=5e-3, rtol=5e-3), \
        float(jnp.max(jnp.abs(z_out - z_ref)))
    print("KERNEL_OK")
</pallas_src>

<mosaic_0001>
module attributes {stable_mosaic.version = 11 : i64} {
  func.func @_transition_kernel(%arg0: i32, %arg1: memref<128x64xf32, #tpu.memory_space<vmem>>, %arg2: memref<1x64xf32, #tpu.memory_space<vmem>>, %arg3: memref<1x64xf32, #tpu.memory_space<vmem>>, %arg4: memref<64x256xf32, #tpu.memory_space<vmem>>, %arg5: memref<64x256xf32, #tpu.memory_space<vmem>>, %arg6: memref<256x64xf32, #tpu.memory_space<vmem>>, %arg7: memref<128x64xf32, #tpu.memory_space<vmem>>) attributes {dimension_semantics = [#tpu.dimension_semantics<parallel>], iteration_bounds = array<i64: 1>, scalar_prefetch = 0 : i64, scratch_operands = 0 : i64, tpu.core_type = #tpu.core_type<tc>, window_params = [{transform_indices = @transform_0, window_bounds = array<i64: 128, 64>}, {pipeline_mode = #tpu.pipeline_mode<synchronous>, transform_indices = @transform_1, window_bounds = array<i64: 1, 64>}, {pipeline_mode = #tpu.pipeline_mode<synchronous>, transform_indices = @transform_2, window_bounds = array<i64: 1, 64>}, {pipeline_mode = #tpu.pipeline_mode<synchronous>, transform_indices = @transform_3, window_bounds = array<i64: 64, 256>}, {pipeline_mode = #tpu.pipeline_mode<synchronous>, transform_indices = @transform_4, window_bounds = array<i64: 64, 256>}, {pipeline_mode = #tpu.pipeline_mode<synchronous>, transform_indices = @transform_5, window_bounds = array<i64: 256, 64>}, {transform_indices = @transform_6, window_bounds = array<i64: 128, 64>}]} {
    %c0 = arith.constant 0 : index
    %c0_0 = arith.constant 0 : index
    %0 = vector.load %arg1[%c0, %c0_0] : memref<128x64xf32, #tpu.memory_space<vmem>>, vector<128x64xf32>
    %cst = arith.constant dense<0.000000e+00> : vector<128xf32>
    %1 = vector.multi_reduction <add>, %0, %cst [1] : vector<128x64xf32> to vector<128xf32>
    %2 = vector.shape_cast %1 : vector<128xf32> to vector<128x1xf32>
    %cst_1 = arith.constant 6.400000e+01 : f32
    %3 = vector.broadcast %cst_1 : f32 to vector<128x1xf32>
    %4 = arith.divf %2, %3 : vector<128x1xf32>
    %5 = vector.broadcast %4 : vector<128x1xf32> to vector<128x64xf32>
    %6 = arith.subf %0, %5 : vector<128x64xf32>
    %7 = arith.mulf %6, %6 : vector<128x64xf32>
    %cst_2 = arith.constant dense<0.000000e+00> : vector<128xf32>
    %8 = vector.multi_reduction <add>, %7, %cst_2 [1] : vector<128x64xf32> to vector<128xf32>
    %9 = vector.shape_cast %8 : vector<128xf32> to vector<128x1xf32>
    %cst_3 = arith.constant 6.400000e+01 : f32
    %10 = vector.broadcast %cst_3 : f32 to vector<128x1xf32>
    %11 = arith.divf %9, %10 : vector<128x1xf32>
    %cst_4 = arith.constant 9.99999974E-6 : f32
    %12 = vector.broadcast %cst_4 : f32 to vector<128x1xf32>
    %13 = arith.addf %11, %12 : vector<128x1xf32>
    %14 = math.rsqrt %13 : vector<128x1xf32>
    %15 = vector.broadcast %14 : vector<128x1xf32> to vector<128x64xf32>
    %16 = arith.mulf %6, %15 : vector<128x64xf32>
    %c0_5 = arith.constant 0 : index
    %c0_6 = arith.constant 0 : index
    %17 = vector.load %arg2[%c0_5, %c0_6] : memref<1x64xf32, #tpu.memory_space<vmem>>, vector<1x64xf32>
    %18 = vector.broadcast %17 : vector<1x64xf32> to vector<128x64xf32>
    %19 = arith.mulf %16, %18 : vector<128x64xf32>
    %c0_7 = arith.constant 0 : index
    %c0_8 = arith.constant 0 : index
    %20 = vector.load %arg3[%c0_7, %c0_8] : memref<1x64xf32, #tpu.memory_space<vmem>>, vector<1x64xf32>
    %21 = vector.broadcast %20 : vector<1x64xf32> to vector<128x64xf32>
    %22 = arith.addf %19, %21 : vector<128x64xf32>
    %c0_9 = arith.constant 0 : index
    %c0_10 = arith.constant 0 : index
    %23 = vector.load %arg4[%c0_9, %c0_10] : memref<64x256xf32, #tpu.memory_space<vmem>>, vector<64x256xf32>
    %cst_11 = arith.constant dense<0.000000e+00> : vector<128x256xf32>
    %24 = tpu.matmul %22, %23, %cst_11 {dimension_numbers = #tpu.dot_dimension_numbers<[1], [0], [0], [1], [0, 0, 1, 1], [], []>} : vector<128x64xf32>, vector<64x256xf32>, vector<128x256xf32> -> vector<128x256xf32>
    %c0_12 = arith.constant 0 : index
    %c0_13 = arith.constant 0 : index
    %25 = vector.load %arg5[%c0_12, %c0_13] : memref<64x256xf32, #tpu.memory_space<vmem>>, vector<64x256xf32>
    %cst_14 = arith.constant dense<0.000000e+00> : vector<128x256xf32>
    %26 = tpu.matmul %22, %25, %cst_14 {dimension_numbers = #tpu.dot_dimension_numbers<[1], [0], [0], [1], [0, 0, 1, 1], [], []>} : vector<128x64xf32>, vector<64x256xf32>, vector<128x256xf32> -> vector<128x256xf32>
    %27 = arith.negf %24 : vector<128x256xf32>
    %28 = math.exp %27 : vector<128x256xf32>
    %cst_15 = arith.constant 1.000000e+00 : f32
    %29 = vector.broadcast %cst_15 : f32 to vector<128x256xf32>
    %30 = arith.addf %29, %28 : vector<128x256xf32>
    %31 = arith.divf %29, %30 : vector<128x256xf32>
    %32 = arith.mulf %24, %31 : vector<128x256xf32>
    %33 = arith.mulf %32, %26 : vector<128x256xf32>
    %c0_16 = arith.constant 0 : index
    %c0_17 = arith.constant 0 : index
    %34 = vector.load %arg6[%c0_16, %c0_17] : memref<256x64xf32, #tpu.memory_space<vmem>>, vector<256x64xf32>
    %cst_18 = arith.constant dense<0.000000e+00> : vector<128x64xf32>
    %35 = tpu.matmul %33, %34, %cst_18 {dimension_numbers = #tpu.dot_dimension_numbers<[1], [0], [0], [1], [0, 0, 1, 1], [], []>} : vector<128x256xf32>, vector<256x64xf32>, vector<128x64xf32> -> vector<128x64xf32>
    %36 = arith.addf %0, %35 : vector<128x64xf32>
    %c0_19 = arith.constant 0 : index
    %c0_20 = arith.constant 0 : index
    %37 = vector.load %arg7[%c0_19, %c0_20] : memref<128x64xf32, #tpu.memory_space<vmem>>, vector<128x64xf32>
    tpu.vector_store %arg7[%c0_19, %c0_20], %36 {strides = array<i32>} : memref<128x64xf32, #tpu.memory_space<vmem>>, vector<128x64xf32>,
    return
  }
  func.func @transform_0(%arg0: i32) -> (i32, i32) {
    %c0_i32 = arith.constant 0 : i32
    %c0_i32_0 = arith.constant 0 : i32
    return %arg0, %c0_i32 : i32, i32
  }
  func.func @transform_1(%arg0: i32) -> (i32, i32) {
    %c0_i32 = arith.constant 0 : i32
    %c0_i32_0 = arith.constant 0 : i32
    %c0_i32_1 = arith.constant 0 : i32
    return %c0_i32, %c0_i32_0 : i32, i32
  }
  func.func @transform_2(%arg0: i32) -> (i32, i32) {
    %c0_i32 = arith.constant 0 : i32
    %c0_i32_0 = arith.constant 0 : i32
    %c0_i32_1 = arith.constant 0 : i32
    return %c0_i32, %c0_i32_0 : i32, i32
  }
  func.func @transform_3(%arg0: i32) -> (i32, i32) {
    %c0_i32 = arith.constant 0 : i32
    %c0_i32_0 = arith.constant 0 : i32
    %c0_i32_1 = arith.constant 0 : i32
    return %c0_i32, %c0_i32_0 : i32, i32
  }
  func.func @transform_4(%arg0: i32) -> (i32, i32) {
    %c0_i32 = arith.constant 0 : i32
    %c0_i32_0 = arith.constant 0 : i32
    %c0_i32_1 = arith.constant 0 : i32
    return %c0_i32, %c0_i32_0 : i32, i32
  }
  func.func @transform_5(%arg0: i32) -> (i32, i32) {
    %c0_i32 = arith.constant 0 : i32
    %c0_i32_0 = arith.constant 0 : i32
    %c0_i32_1 = arith.constant 0 : i32
    return %c0_i32, %c0_i32_0 : i32, i32
  }
  func.func @transform_6(%arg0: i32) -> (i32, i32) {
    %c0_i32 = arith.constant 0 : i32
    %c0_i32_0 = arith.constant 0 : i32
    return %arg0, %c0_i32 : i32, i32
  }
}

</mosaic_0001>

<llo_original>
// kernel: tpu_custom_call.1
$region0: #{tpu_custom_call.1}
  #allocation0 [shape = 'u32[]', space=smem, size = 0x4, offset = 0x4, fixed_abs, tag = 'smem constant byte address 0x4 - core index']
  #allocation1 [shape = 'u32[72,128]{1,0:T(1,128)}', space=vmem, size = 0x9000, scoped, tag = 'internal scratch']
  %s0 = inlined_call_operand.vmem [shape: f32[128,64], index: 0, kind: input, shape index: {}]
  %s1 = inlined_call_operand.vmem [shape: f32[1,64], index: 1, kind: input, shape index: {}]
  %s2 = inlined_call_operand.vmem [shape: f32[1,64], index: 2, kind: input, shape index: {}]
  %s3 = inlined_call_operand.vmem [shape: f32[64,256], index: 3, kind: input, shape index: {}]
  %s4 = inlined_call_operand.vmem [shape: f32[64,256], index: 4, kind: input, shape index: {}]
  %s5 = inlined_call_operand.vmem [shape: f32[256,64], index: 5, kind: input, shape index: {}]
  %s6 = inlined_call_operand.vmem [shape: f32[128,64], index: 6, kind: output, shape index: {}]
  %s7 = sld [smem:[#allocation0]]
  $region34: #{tpu_custom_call.1} parent=0
    _
  %s9 = ssub.s32 1, %s7
  %s10 = scalar_select 0, %s9, %s7
  // Predicated region
  $region2: #{tpu_custom_call.1} parent=0 // pred_check
    _
  $region3: #{tpu_custom_call.1} parent=0 // pred_check_branch
    %12 = sbr.rel (0) target = $region5
  $region4: #{tpu_custom_call.1} parent=0 // pred_region
    _
  $region5: #{tpu_custom_call.1} parent=0 // pred_fallthru
    _
  // Predicated region
  $region6: #{tpu_custom_call.1} parent=0 // pred_check
    _
  $region7: #{tpu_custom_call.1} parent=0 // pred_check_branch
    %14 = sbr.rel (0) target = $region9
  $region8: #{tpu_custom_call.1} parent=0 // pred_region
    _
  $region9: #{tpu_custom_call.1} parent=0 // pred_fallthru
    _
  // Predicated region
  $region10: #{tpu_custom_call.1} parent=0 // pred_check
    _
  $region11: #{tpu_custom_call.1} parent=0 // pred_check_branch
    %16 = sbr.rel (0) target = $region13
  $region12: #{tpu_custom_call.1} parent=0 // pred_region
    _
  $region13: #{tpu_custom_call.1} parent=0 // pred_fallthru
    _
  // Predicated region
  $region14: #{tpu_custom_call.1} parent=0 // pred_check
    _
  $region15: #{tpu_custom_call.1} parent=0 // pred_check_branch
    %18 = sbr.rel (0) target = $region17
  $region16: #{tpu_custom_call.1} parent=0 // pred_region
    _
  $region17: #{tpu_custom_call.1} parent=0 // pred_fallthru
    _
  // Predicated region
  $region18: #{tpu_custom_call.1} parent=0 // pred_check
    _
  $region19: #{tpu_custom_call.1} parent=0 // pred_check_branch
    %20 = sbr.rel (0) target = $region21
  $region20: #{tpu_custom_call.1} parent=0 // pred_region
    _
  $region21: #{tpu_custom_call.1} parent=0 // pred_fallthru
    _
  // Predicated region
  $region22: #{tpu_custom_call.1} parent=0 // pred_check
    _
  $region23: #{tpu_custom_call.1} parent=0 // pred_check_branch
    %22 = sbr.rel (0) target = $region25
  $region24: #{tpu_custom_call.1} parent=0 // pred_region
    _
  $region25: #{tpu_custom_call.1} parent=0 // pred_fallthru
    _
  %v23 = vld [vmem:[%s0] sm:$0xff]
  %v24 = vld [vmem:[%s0 + $0x8] sm:$0xff]
  %v25 = vld [vmem:[%s0 + $0x10] sm:$0xff]
  %v26 = vld [vmem:[%s0 + $0x18] sm:$0xff]
  %v27 = vld [vmem:[%s0 + $0x20] sm:$0xff]
  %v28 = vld [vmem:[%s0 + $0x28] sm:$0xff]
  %v29 = vld [vmem:[%s0 + $0x30] sm:$0xff]
  %v30 = vld [vmem:[%s0 + $0x38] sm:$0xff]
  %v31 = vld [vmem:[%s0 + $0x40] sm:$0xff]
  %v32 = vld [vmem:[%s0 + $0x48] sm:$0xff]
  %v33 = vld [vmem:[%s0 + $0x50] sm:$0xff]
  %v34 = vld [vmem:[%s0 + $0x58] sm:$0xff]
  %v35 = vld [vmem:[%s0 + $0x60] sm:$0xff]
  %v36 = vld [vmem:[%s0 + $0x68] sm:$0xff]
  %v37 = vld [vmem:[%s0 + $0x70] sm:$0xff]
  %v38 = vld [vmem:[%s0 + $0x78] sm:$0xff]
  %vm39 = vcmask 523264
  %v40 = vsel %vm39, %v23, 0.0
  %41 = vadd.xlane.f32.xlu0 %v40
  %v42 = vpop.xlane.xlu0 %41
  %v43 = vsel %vm39, %v24, 0.0
  %44 = vadd.xlane.f32.xlu0 %v43
  %v45 = vpop.xlane.xlu0 %44
  %v46 = vsel %vm39, %v25, 0.0
  %47 = vadd.xlane.f32.xlu0 %v46
  %v48 = vpop.xlane.xlu0 %47
  %v49 = vsel %vm39, %v26, 0.0
  %50 = vadd.xlane.f32.xlu0 %v49
  %v51 = vpop.xlane.xlu0 %50
  %v52 = vsel %vm39, %v27, 0.0
  %53 = vadd.xlane.f32.xlu0 %v52
  %v54 = vpop.xlane.xlu0 %53
  %v55 = vsel %vm39, %v28, 0.0
  %56 = vadd.xlane.f32.xlu0 %v55
  %v57 = vpop.xlane.xlu0 %56
  %v58 = vsel %vm39, %v29, 0.0
  %59 = vadd.xlane.f32.xlu0 %v58
  %v60 = vpop.xlane.xlu0 %59
  %v61 = vsel %vm39, %v30, 0.0
  %62 = vadd.xlane.f32.xlu0 %v61
  %v63 = vpop.xlane.xlu0 %62
  %v64 = vsel %vm39, %v31, 0.0
  %65 = vadd.xlane.f32.xlu0 %v64
  %v66 = vpop.xlane.xlu0 %65
  %v67 = vsel %vm39, %v32, 0.0
  %68 = vadd.xlane.f32.xlu0 %v67
  %v69 = vpop.xlane.xlu0 %68
  %v70 = vsel %vm39, %v33, 0.0
  %71 = vadd.xlane.f32.xlu0 %v70
  %v72 = vpop.xlane.xlu0 %71
  %v73 = vsel %vm39, %v34, 0.0
  %74 = vadd.xlane.f32.xlu0 %v73
  %v75 = vpop.xlane.xlu0 %74
  %v76 = vsel %vm39, %v35, 0.0
  %77 = vadd.xlane.f32.xlu0 %v76
  %v78 = vpop.xlane.xlu0 %77
  %v79 = vsel %vm39, %v36, 0.0
  %80 = vadd.xlane.f32.xlu0 %v79
  %v81 = vpop.xlane.xlu0 %80
  %v82 = vsel %vm39, %v37, 0.0
  %83 = vadd.xlane.f32.xlu0 %v82
  %v84 = vpop.xlane.xlu0 %83
  %v85 = vsel %vm39, %v38, 0.0
  %86 = vadd.xlane.f32.xlu0 %v85
  %v87 = vpop.xlane.xlu0 %86
  %v88 = vrcp.pop 64.0
  %v89 = vmul.f32 64.0, %v88
  %v90 = vsub.f32 1.0, %v89
  %v91 = vmul.f32 %v88, %v90
  %v92 = vadd.f32 %v88, %v91
  %vm93 = vweird.f32 %v88
  %v94 = vsel %vm93, %v88, %v92
  %v95 = vmul.f32 %v42, %v94
  %v96 = vmul.f32 %v45, %v94
  %v97 = vmul.f32 %v48, %v94
  %v98 = vmul.f32 %v51, %v94
  %v99 = vmul.f32 %v54, %v94
  %v100 = vmul.f32 %v57, %v94
  %v101 = vmul.f32 %v60, %v94
  %v102 = vmul.f32 %v63, %v94
  %v103 = vmul.f32 %v66, %v94
  %v104 = vmul.f32 %v69, %v94
  %v105 = vmul.f32 %v72, %v94
  %v106 = vmul.f32 %v75, %v94
  %v107 = vmul.f32 %v78, %v94
  %v108 = vmul.f32 %v81, %v94
  %v109 = vmul.f32 %v84, %v94
  %v110 = vmul.f32 %v87, %v94
  %v111 = vsub.f32 %v23, %v95
  %v112 = vsub.f32 %v24, %v96
  %v113 = vsub.f32 %v25, %v97
  %v114 = vsub.f32 %v26, %v98
  %v115 = vsub.f32 %v27, %v99
  %v116 = vsub.f32 %v28, %v100
  %v117 = vsub.f32 %v29, %v101
  %v118 = vsub.f32 %v30, %v102
  %v119 = vsub.f32 %v31, %v103
  %v120 = vsub.f32 %v32, %v104
  %v121 = vsub.f32 %v33, %v105
  %v122 = vsub.f32 %v34, %v106
  %v123 = vsub.f32 %v35, %v107
  %v124 = vsub.f32 %v36, %v108
  %v125 = vsub.f32 %v37, %v109
  %v126 = vsub.f32 %v38, %v110
  %v127 = vmul.f32 %v111, %v111
  %v128 = vmul.f32 %v112, %v112
  %v129 = vmul.f32 %v113, %v113
  %v130 = vmul.f32 %v114, %v114
  %v131 = vmul.f32 %v115, %v115
  %v132 = vmul.f32 %v116, %v116
  %v133 = vmul.f32 %v117, %v117
  %v134 = vmul.f32 %v118, %v118
  %v135 = vmul.f32 %v119, %v119
  %v136 = vmul.f32 %v120, %v120
  %v137 = vmul.f32 %v121, %v121
  %v138 = vmul.f32 %v122, %v122
  %v139 = vmul.f32 %v123, %v123
  %v140 = vmul.f32 %v124, %v124
  %v141 = vmul.f32 %v125, %v125
  %v142 = vmul.f32 %v126, %v126
  %v143 = vsel %vm39, %v127, 0.0
  %144 = vadd.xlane.f32.xlu0 %v143
  %v145 = vpop.xlane.xlu0 %144
  %v146 = vsel %vm39, %v128, 0.0
  %147 = vadd.xlane.f32.xlu0 %v146
  %v148 = vpop.xlane.xlu0 %147
  %v149 = vsel %vm39, %v129, 0.0
  %150 = vadd.xlane.f32.xlu0 %v149
  %v151 = vpop.xlane.xlu0 %150
  %v152 = vsel %vm39, %v130, 0.0
  %153 = vadd.xlane.f32.xlu0 %v152
  %v154 = vpop.xlane.xlu0 %153
  %v155 = vsel %vm39, %v131, 0.0
  %156 = vadd.xlane.f32.xlu0 %v155
  %v157 = vpop.xlane.xlu0 %156
  %v158 = vsel %vm39, %v132, 0.0
  %159 = vadd.xlane.f32.xlu0 %v158
  %v160 = vpop.xlane.xlu0 %159
  %v161 = vsel %vm39, %v133, 0.0
  %162 = vadd.xlane.f32.xlu0 %v161
  %v163 = vpop.xlane.xlu0 %162
  %v164 = vsel %vm39, %v134, 0.0
  %165 = vadd.xlane.f32.xlu0 %v164
  %v166 = vpop.xlane.xlu0 %165
  %v167 = vsel %vm39, %v135, 0.0
  %168 = vadd.xlane.f32.xlu0 %v167
  %v169 = vpop.xlane.xlu0 %168
  %v170 = vsel %vm39, %v136, 0.0
  %171 = vadd.xlane.f32.xlu0 %v170
  %v172 = vpop.xlane.xlu0 %171
  %v173 = vsel %vm39, %v137, 0.0
  %174 = vadd.xlane.f32.xlu0 %v173
  %v175 = vpop.xlane.xlu0 %174
  %v176 = vsel %vm39, %v138, 0.0
  %177 = vadd.xlane.f32.xlu0 %v176
  %v178 = vpop.xlane.xlu0 %177
  %v179 = vsel %vm39, %v139, 0.0
  %180 = vadd.xlane.f32.xlu0 %v179
  %v181 = vpop.xlane.xlu0 %180
  %v182 = vsel %vm39, %v140, 0.0
  %183 = vadd.xlane.f32.xlu0 %v182
  %v184 = vpop.xlane.xlu0 %183
  %v185 = vsel %vm39, %v141, 0.0
  %186 = vadd.xlane.f32.xlu0 %v185
  %v187 = vpop.xlane.xlu0 %186
  %v188 = vsel %vm39, %v142, 0.0
  %189 = vadd.xlane.f32.xlu0 %v188
  %v190 = vpop.xlane.xlu0 %189
  %v191 = vmul.f32 %v145, %v94
  %v192 = vmul.f32 %v148, %v94
  %v193 = vmul.f32 %v151, %v94
  %v194 = vmul.f32 %v154, %v94
  %v195 = vmul.f32 %v157, %v94
  %v196 = vmul.f32 %v160, %v94
  %v197 = vmul.f32 %v163, %v94
  %v198 = vmul.f32 %v166, %v94
  %v199 = vmul.f32 %v169, %v94
  %v200 = vmul.f32 %v172, %v94
  %v201 = vmul.f32 %v175, %v94
  %v202 = vmul.f32 %v178, %v94
  %v203 = vmul.f32 %v181, %v94
  %v204 = vmul.f32 %v184, %v94
  %v205 = vmul.f32 %v187, %v94
  %v206 = vmul.f32 %v190, %v94
  %v207 = vadd.f32 %v191, 1e-05
  %v208 = vadd.f32 %v192, 1e-05
  %v209 = vadd.f32 %v193, 1e-05
  %v210 = vadd.f32 %v194, 1e-05
  %v211 = vadd.f32 %v195, 1e-05
  %v212 = vadd.f32 %v196, 1e-05
  %v213 = vadd.f32 %v197, 1e-05
  %v214 = vadd.f32 %v198, 1e-05
  %v215 = vadd.f32 %v199, 1e-05
  %v216 = vadd.f32 %v200, 1e-05
  %v217 = vadd.f32 %v201, 1e-05
  %v218 = vadd.f32 %v202, 1e-05
  %v219 = vadd.f32 %v203, 1e-05
  %v220 = vadd.f32 %v204, 1e-05
  %v221 = vadd.f32 %v205, 1e-05
  %v222 = vadd.f32 %v206, 1e-05
  %v223 = vrsqrt.pop %v207
  %v224 = vmul.f32 %v223, %v207
  %v225 = vmul.f32 %v224, %v223
  %v226 = vmul.f32 0.5, %v225
  %v227 = vsub.f32 1.5, %v226
  %v228 = vmul.f32 %v223, %v227
  %vm229 = vweird.f32 %v207
  %vm230 = vweird.f32 %v223
  %vm231 = vmor %vm229, %vm230
  %v232 = vsel %vm231, %v223, %v228
  %v233 = vrsqrt.pop %v208
  %v234 = vmul.f32 %v233, %v208
  %v235 = vmul.f32 %v234, %v233
  %v236 = vmul.f32 0.5, %v235
  %v237 = vsub.f32 1.5, %v236
  %v238 = vmul.f32 %v233, %v237
  %vm239 = vweird.f32 %v208
  %vm240 = vweird.f32 %v233
  %vm241 = vmor %vm239, %vm240
  %v242 = vsel %vm241, %v233, %v238
  %v243 = vrsqrt.pop %v209
  %v244 = vmul.f32 %v243, %v209
  %v245 = vmul.f32 %v244, %v243
  %v246 = vmul.f32 0.5, %v245
  %v247 = vsub.f32 1.5, %v246
  %v248 = vmul.f32 %v243, %v247
  %vm249 = vweird.f32 %v209
  %vm250 = vweird.f32 %v243
  %vm251 = vmor %vm249, %vm250
  %v252 = vsel %vm251, %v243, %v248
  %v253 = vrsqrt.pop %v210
  %v254 = vmul.f32 %v253, %v210
  %v255 = vmul.f32 %v254, %v253
  %v256 = vmul.f32 0.5, %v255
  %v257 = vsub.f32 1.5, %v256
  %v258 = vmul.f32 %v253, %v257
  %vm259 = vweird.f32 %v210
  %vm260 = vweird.f32 %v253
  %vm261 = vmor %vm259, %vm260
  %v262 = vsel %vm261, %v253, %v258
  %v263 = vrsqrt.pop %v211
  %v264 = vmul.f32 %v263, %v211
  %v265 = vmul.f32 %v264, %v263
  %v266 = vmul.f32 0.5, %v265
  %v267 = vsub.f32 1.5, %v266
  %v268 = vmul.f32 %v263, %v267
  %vm269 = vweird.f32 %v211
  %vm270 = vweird.f32 %v263
  %vm271 = vmor %vm269, %vm270
  %v272 = vsel %vm271, %v263, %v268
  %v273 = vrsqrt.pop %v212
  %v274 = vmul.f32 %v273, %v212
  %v275 = vmul.f32 %v274, %v273
  %v276 = vmul.f32 0.5, %v275
  %v277 = vsub.f32 1.5, %v276
  %v278 = vmul.f32 %v273, %v277
  %vm279 = vweird.f32 %v212
  %vm280 = vweird.f32 %v273
  %vm281 = vmor %vm279, %vm280
  %v282 = vsel %vm281, %v273, %v278
  %v283 = vrsqrt.pop %v213
  %v284 = vmul.f32 %v283, %v213
  %v285 = vmul.f32 %v284, %v283
  %v286 = vmul.f32 0.5, %v285
  %v287 = vsub.f32 1.5, %v286
  %v288 = vmul.f32 %v283, %v287
  %vm289 = vweird.f32 %v213
  %vm290 = vweird.f32 %v283
  %vm291 = vmor %vm289, %vm290
  %v292 = vsel %vm291, %v283, %v288
  %v293 = vrsqrt.pop %v214
  %v294 = vmul.f32 %v293, %v214
  %v295 = vmul.f32 %v294, %v293
  %v296 = vmul.f32 0.5, %v295
  %v297 = vsub.f32 1.5, %v296
  %v298 = vmul.f32 %v293, %v297
  %vm299 = vweird.f32 %v214
  %vm300 = vweird.f32 %v293
  %vm301 = vmor %vm299, %vm300
  %v302 = vsel %vm301, %v293, %v298
  %v303 = vrsqrt.pop %v215
  %v304 = vmul.f32 %v303, %v215
  %v305 = vmul.f32 %v304, %v303
  %v306 = vmul.f32 0.5, %v305
  %v307 = vsub.f32 1.5, %v306
  %v308 = vmul.f32 %v303, %v307
  %vm309 = vweird.f32 %v215
  %vm310 = vweird.f32 %v303
  %vm311 = vmor %vm309, %vm310
  %v312 = vsel %vm311, %v303, %v308
  %v313 = vrsqrt.pop %v216
  %v314 = vmul.f32 %v313, %v216
  %v315 = vmul.f32 %v314, %v313
  %v316 = vmul.f32 0.5, %v315
  %v317 = vsub.f32 1.5, %v316
  %v318 = vmul.f32 %v313, %v317
  %vm319 = vweird.f32 %v216
  %vm320 = vweird.f32 %v313
  %vm321 = vmor %vm319, %vm320
  %v322 = vsel %vm321, %v313, %v318
  %v323 = vrsqrt.pop %v217
  %v324 = vmul.f32 %v323, %v217
  %v325 = vmul.f32 %v324, %v323
  %v326 = vmul.f32 0.5, %v325
  %v327 = vsub.f32 1.5, %v326
  %v328 = vmul.f32 %v323, %v327
  %vm329 = vweird.f32 %v217
  %vm330 = vweird.f32 %v323
  %vm331 = vmor %vm329, %vm330
  %v332 = vsel %vm331, %v323, %v328
  %v333 = vrsqrt.pop %v218
  %v334 = vmul.f32 %v333, %v218
  %v335 = vmul.f32 %v334, %v333
  %v336 = vmul.f32 0.5, %v335
  %v337 = vsub.f32 1.5, %v336
  %v338 = vmul.f32 %v333, %v337
  %vm339 = vweird.f32 %v218
  %vm340 = vweird.f32 %v333
  %vm341 = vmor %vm339, %vm340
  %v342 = vsel %vm341, %v333, %v338
  %v343 = vrsqrt.pop %v219
  %v344 = vmul.f32 %v343, %v219
  %v345 = vmul.f32 %v344, %v343
  %v346 = vmul.f32 0.5, %v345
  %v347 = vsub.f32 1.5, %v346
  %v348 = vmul.f32 %v343, %v347
  %vm349 = vweird.f32 %v219
  %vm350 = vweird.f32 %v343
  %vm351 = vmor %vm349, %vm350
  %v352 = vsel %vm351, %v343, %v348
  %v353 = vrsqrt.pop %v220
  %v354 = vmul.f32 %v353, %v220
  %v355 = vmul.f32 %v354, %v353
  %v356 = vmul.f32 0.5, %v355
  %v357 = vsub.f32 1.5, %v356
  %v358 = vmul.f32 %v353, %v357
  %vm359 = vweird.f32 %v220
  %vm360 = vweird.f32 %v353
  %vm361 = vmor %vm359, %vm360
  %v362 = vsel %vm361, %v353, %v358
  %v363 = vrsqrt.pop %v221
  %v364 = vmul.f32 %v363, %v221
  %v365 = vmul.f32 %v364, %v363
  %v366 = vmul.f32 0.5, %v365
  %v367 = vsub.f32 1.5, %v366
  %v368 = vmul.f32 %v363, %v367
  %vm369 = vweird.f32 %v221
  %vm370 = vweird.f32 %v363
  %vm371 = vmor %vm369, %vm370
  %v372 = vsel %vm371, %v363, %v368
  %v373 = vrsqrt.pop %v222
  %v374 = vmul.f32 %v373, %v222
  %v375 = vmul.f32 %v374, %v373
  %v376 = vmul.f32 0.5, %v375
  %v377 = vsub.f32 1.5, %v376
  %v378 = vmul.f32 %v373, %v377
  %vm379 = vweird.f32 %v222
  %vm380 = vweird.f32 %v373
  %vm381 = vmor %vm379, %vm380
  %v382 = vsel %vm381, %v373, %v378
  %v383 = vmul.f32 %v111, %v232
  %v384 = vmul.f32 %v112, %v242
  %v385 = vmul.f32 %v113, %v252
  %v386 = vmul.f32 %v114, %v262
  %v387 = vmul.f32 %v115, %v272
  %v388 = vmul.f32 %v116, %v282
  %v389 = vmul.f32 %v117, %v292
  %v390 = vmul.f32 %v118, %v302
  %v391 = vmul.f32 %v119, %v312
  %v392 = vmul.f32 %v120, %v322
  %v393 = vmul.f32 %v121, %v332
  %v394 = vmul.f32 %v122, %v342
  %v395 = vmul.f32 %v123, %v352
  %v396 = vmul.f32 %v124, %v362
  %v397 = vmul.f32 %v125, %v372
  %v398 = vmul.f32 %v126, %v382
  %v399 = vld [vmem:[%s1] sm:$0x1]
  %v401 = vperm.slane %v399, 0
  %v403 = vmul.f32 %v383, %v401
  %v404 = vmul.f32 %v384, %v401
  %v405 = vmul.f32 %v385, %v401
  %v406 = vmul.f32 %v386, %v401
  %v407 = vmul.f32 %v387, %v401
  %v408 = vmul.f32 %v388, %v401
  %v409 = vmul.f32 %v389, %v401
  %v410 = vmul.f32 %v390, %v401
  %v411 = vmul.f32 %v391, %v401
  %v412 = vmul.f32 %v392, %v401
  %v413 = vmul.f32 %v393, %v401
  %v414 = vmul.f32 %v394, %v401
  %v415 = vmul.f32 %v395, %v401
  %v416 = vmul.f32 %v396, %v401
  %v417 = vmul.f32 %v397, %v401
  %v418 = vmul.f32 %v398, %v401
  %v419 = vld [vmem:[%s2] sm:$0x1]
  %v421 = vperm.slane %v419, 0
  %v423 = vadd.f32 %v403, %v421
  %v424 = vadd.f32 %v404, %v421
  %v425 = vadd.f32 %v405, %v421
  %v426 = vadd.f32 %v406, %v421
  %v427 = vadd.f32 %v407, %v421
  %v428 = vadd.f32 %v408, %v421
  %v429 = vadd.f32 %v409, %v421
  %v430 = vadd.f32 %v410, %v421
  %v431 = vadd.f32 %v411, %v421
  %v432 = vadd.f32 %v412, %v421
  %v433 = vadd.f32 %v413, %v421
  %v434 = vadd.f32 %v414, %v421
  %v435 = vadd.f32 %v415, %v421
  %v436 = vadd.f32 %v416, %v421
  %v437 = vadd.f32 %v417, %v421
  %v438 = vadd.f32 %v418, %v421
  %v439 = vld [vmem:[%s3] sm:$0xff]
  %v440 = vld [vmem:[%s3 + $0x8] sm:$0xff]
  %v441 = vld [vmem:[%s3 + $0x10] sm:$0xff]
  %v442 = vld [vmem:[%s3 + $0x18] sm:$0xff]
  %v443 = vld [vmem:[%s3 + $0x20] sm:$0xff]
  %v444 = vld [vmem:[%s3 + $0x28] sm:$0xff]
  %v445 = vld [vmem:[%s3 + $0x30] sm:$0xff]
  %v446 = vld [vmem:[%s3 + $0x38] sm:$0xff]
  %v447 = vld [vmem:[%s3 + $0x40] sm:$0xff]
  %v448 = vld [vmem:[%s3 + $0x48] sm:$0xff]
  %v449 = vld [vmem:[%s3 + $0x50] sm:$0xff]
  %v450 = vld [vmem:[%s3 + $0x58] sm:$0xff]
  %v451 = vld [vmem:[%s3 + $0x60] sm:$0xff]
  %v452 = vld [vmem:[%s3 + $0x68] sm:$0xff]
  %v453 = vld [vmem:[%s3 + $0x70] sm:$0xff]
  %v454 = vld [vmem:[%s3 + $0x78] sm:$0xff]
  %v456 = vsel %vm39, %v423, 0
  %v459 = vsel %vm39, %v424, 0
  %v462 = vsel %vm39, %v425, 0
  %v465 = vsel %vm39, %v426, 0
  %v468 = vsel %vm39, %v427, 0
  %v471 = vsel %vm39, %v428, 0
  %v474 = vsel %vm39, %v429, 0
  %v477 = vsel %vm39, %v430, 0
  %v480 = vsel %vm39, %v431, 0
  %v483 = vsel %vm39, %v432, 0
  %v486 = vsel %vm39, %v433, 0
  %v489 = vsel %vm39, %v434, 0
  %v492 = vsel %vm39, %v435, 0
  %v495 = vsel %vm39, %v436, 0
  %v498 = vsel %vm39, %v437, 0
  %v501 = vsel %vm39, %v438, 0
  %503 = vmatpush.msra.mxu0 0.0
  %504 = vmatpush.msra.mxu0 0.0
  %505 = vmatpush.msra.mxu0 0.0
  %506 = vmatpush.msra.mxu0 0.0
  %507 = vmatpush.msra.mxu0 0.0
  %508 = vmatpush.msra.mxu0 0.0
  %509 = vmatpush.msra.mxu0 0.0
  %510 = vmatpush.msra.mxu0 0.0
  %511 = vmatpush.msra.mxu0 %v453
  %512 = vmatpush.msra.mxu0 %v451
  %513 = vmatpush.msra.mxu0 %v449
  %514 = vmatpush.msra.mxu0 %v447
  %515 = vmatpush.msra.mxu0 %v445
  %516 = vmatpush.msra.mxu0 %v443
  %517 = vmatpush.msra.mxu0 %v441
  %518 = vmatpush.msra.mxu0 %v439
  %519 = vmatmul.f32.gmra.mxu0 %v456
  %v520 = vpop.f32.mrf.mxu0
  %v521 = vadd.f32 0.0, %v520
  %522 = vmatmul.f32.gmra.mxu0 %v459
  %v523 = vpop.f32.mrf.mxu0
  %v524 = vadd.f32 0.0, %v523
  %525 = vmatmul.f32.gmra.mxu0 %v462
  %v526 = vpop.f32.mrf.mxu0
  %v527 = vadd.f32 0.0, %v526
  %528 = vmatmul.f32.gmra.mxu0 %v465
  %v529 = vpop.f32.mrf.mxu0
  %v530 = vadd.f32 0.0, %v529
  %531 = vmatmul.f32.gmra.mxu0 %v468
  %v532 = vpop.f32.mrf.mxu0
  %v533 = vadd.f32 0.0, %v532
  %534 = vmatmul.f32.gmra.mxu0 %v471
  %v535 = vpop.f32.mrf.mxu0
  %v536 = vadd.f32 0.0, %v535
  %537 = vmatmul.f32.gmra.mxu0 %v474
  %v538 = vpop.f32.mrf.mxu0
  %v539 = vadd.f32 0.0, %v538
  %540 = vmatmul.f32.gmra.mxu0 %v477
  %v541 = vpop.f32.mrf.mxu0
  %v542 = vadd.f32 0.0, %v541
  %543 = vmatmul.f32.gmra.mxu0 %v480
  %v544 = vpop.f32.mrf.mxu0
  %v545 = vadd.f32 0.0, %v544
  %546 = vmatmul.f32.gmra.mxu0 %v483
  %v547 = vpop.f32.mrf.mxu0
  %v548 = vadd.f32 0.0, %v547
  %549 = vmatmul.f32.gmra.mxu0 %v486
  %v550 = vpop.f32.mrf.mxu0
  %v551 = vadd.f32 0.0, %v550
  %552 = vmatmul.f32.gmra.mxu0 %v489
  %v553 = vpop.f32.mrf.mxu0
  %v554 = vadd.f32 0.0, %v553
  %555 = vmatmul.f32.gmra.mxu0 %v492
  %v556 = vpop.f32.mrf.mxu0
  %v557 = vadd.f32 0.0, %v556
  %558 = vmatmul.f32.gmra.mxu0 %v495
  %v559 = vpop.f32.mrf.mxu0
  %v560 = vadd.f32 0.0, %v559
  %561 = vmatmul.f32.gmra.mxu0 %v498
  %v562 = vpop.f32.mrf.mxu0
  %v563 = vadd.f32 0.0, %v562
  %564 = vmatmul.f32.gmra.mxu0 %v501
  %v565 = vpop.f32.mrf.mxu0
  %v566 = vadd.f32 0.0, %v565
  %567 = vdwg.mxu0
  %568 = vmatpush.msra.mxu0 0.0
  %569 = vmatpush.msra.mxu0 0.0
  %570 = vmatpush.msra.mxu0 0.0
  %571 = vmatpush.msra.mxu0 0.0
  %572 = vmatpush.msra.mxu0 0.0
  %573 = vmatpush.msra.mxu0 0.0
  %574 = vmatpush.msra.mxu0 0.0
  %575 = vmatpush.msra.mxu0 0.0
  %576 = vmatpush.msra.mxu0 %v454
  %577 = vmatpush.msra.mxu0 %v452
  %578 = vmatpush.msra.mxu0 %v450
  %579 = vmatpush.msra.mxu0 %v448
  %580 = vmatpush.msra.mxu0 %v446
  %581 = vmatpush.msra.mxu0 %v444
  %582 = vmatpush.msra.mxu0 %v442
  %583 = vmatpush.msra.mxu0 %v440
  %584 = vmatmul.f32.gmra.mxu0 %v456
  %v585 = vpop.f32.mrf.mxu0
  %v586 = vadd.f32 0.0, %v585
  %587 = vmatmul.f32.gmra.mxu0 %v459
  %v588 = vpop.f32.mrf.mxu0
  %v589 = vadd.f32 0.0, %v588
  %590 = vmatmul.f32.gmra.mxu0 %v462
  %v591 = vpop.f32.mrf.mxu0
  %v592 = vadd.f32 0.0, %v591
  %593 = vmatmul.f32.gmra.mxu0 %v465
  %v594 = vpop.f32.mrf.mxu0
  %v595 = vadd.f32 0.0, %v594
  %596 = vmatmul.f32.gmra.mxu0 %v468
  %v597 = vpop.f32.mrf.mxu0
  %v598 = vadd.f32 0.0, %v597
  %599 = vmatmul.f32.gmra.mxu0 %v471
  %v600 = vpop.f32.mrf.mxu0
  %v601 = vadd.f32 0.0, %v600
  %602 = vmatmul.f32.gmra.mxu0 %v474
  %v603 = vpop.f32.mrf.mxu0
  %v604 = vadd.f32 0.0, %v603
  %605 = vmatmul.f32.gmra.mxu0 %v477
  %v606 = vpop.f32.mrf.mxu0
  %v607 = vadd.f32 0.0, %v606
  %608 = vmatmul.f32.gmra.mxu0 %v480
  %v609 = vpop.f32.mrf.mxu0
  %v610 = vadd.f32 0.0, %v609
  %611 = vmatmul.f32.gmra.mxu0 %v483
  %v612 = vpop.f32.mrf.mxu0
  %v613 = vadd.f32 0.0, %v612
  %614 = vmatmul.f32.gmra.mxu0 %v486
  %v615 = vpop.f32.mrf.mxu0
  %v616 = vadd.f32 0.0, %v615
  %617 = vmatmul.f32.gmra.mxu0 %v489
  %v618 = vpop.f32.mrf.mxu0
  %v619 = vadd.f32 0.0, %v618
  %620 = vmatmul.f32.gmra.mxu0 %v492
  %v621 = vpop.f32.mrf.mxu0
  %v622 = vadd.f32 0.0, %v621
  %623 = vmatmul.f32.gmra.mxu0 %v495
  %v624 = vpop.f32.mrf.mxu0
  %v625 = vadd.f32 0.0, %v624
  %626 = vmatmul.f32.gmra.mxu0 %v498
  %v627 = vpop.f32.mrf.mxu0
  %v628 = vadd.f32 0.0, %v627
  %629 = vmatmul.f32.gmra.mxu0 %v501
  %v630 = vpop.f32.mrf.mxu0
  %v631 = vadd.f32 0.0, %v630
  %632 = vdwg.mxu0
  %v633 = vld [vmem:[%s4] sm:$0xff]
  %v634 = vld [vmem:[%s4 + $0x8] sm:$0xff]
  %v635 = vld [vmem:[%s4 + $0x10] sm:$0xff]
  %v636 = vld [vmem:[%s4 + $0x18] sm:$0xff]
  %v637 = vld [vmem:[%s4 + $0x20] sm:$0xff]
  %v638 = vld [vmem:[%s4 + $0x28] sm:$0xff]
  %v639 = vld [vmem:[%s4 + $0x30] sm:$0xff]
  %v640 = vld [vmem:[%s4 + $0x38] sm:$0xff]
  %v641 = vld [vmem:[%s4 + $0x40] sm:$0xff]
  %v642 = vld [vmem:[%s4 + $0x48] sm:$0xff]
  %v643 = vld [vmem:[%s4 + $0x50] sm:$0xff]
  %v644 = vld [vmem:[%s4 + $0x58] sm:$0xff]
  %v645 = vld [vmem:[%s4 + $0x60] sm:$0xff]
  %v646 = vld [vmem:[%s4 + $0x68] sm:$0xff]
  %v647 = vld [vmem:[%s4 + $0x70] sm:$0xff]
  %v648 = vld [vmem:[%s4 + $0x78] sm:$0xff]
  %649 = vmatpush.msra.mxu0 0.0
  %650 = vmatpush.msra.mxu0 0.0
  %651 = vmatpush.msra.mxu0 0.0
  %652 = vmatpush.msra.mxu0 0.0
  %653 = vmatpush.msra.mxu0 0.0
  %654 = vmatpush.msra.mxu0 0.0
  %655 = vmatpush.msra.mxu0 0.0
  %656 = vmatpush.msra.mxu0 0.0
  %657 = vmatpush.msra.mxu0 %v647
  %658 = vmatpush.msra.mxu0 %v645
  %659 = vmatpush.msra.mxu0 %v643
  %660 = vmatpush.msra.mxu0 %v641
  %661 = vmatpush.msra.mxu0 %v639
  %662 = vmatpush.msra.mxu0 %v637
  %663 = vmatpush.msra.mxu0 %v635
  %664 = vmatpush.msra.mxu0 %v633
  %665 = vmatmul.f32.gmra.mxu0 %v456
  %v666 = vpop.f32.mrf.mxu0
  %v667 = vadd.f32 0.0, %v666
  %668 = vmatmul.f32.gmra.mxu0 %v459
  %v669 = vpop.f32.mrf.mxu0
  %v670 = vadd.f32 0.0, %v669
  %671 = vmatmul.f32.gmra.mxu0 %v462
  %v672 = vpop.f32.mrf.mxu0
  %v673 = vadd.f32 0.0, %v672
  %674 = vmatmul.f32.gmra.mxu0 %v465
  %v675 = vpop.f32.mrf.mxu0
  %v676 = vadd.f32 0.0, %v675
  %677 = vmatmul.f32.gmra.mxu0 %v468
  %v678 = vpop.f32.mrf.mxu0
  %v679 = vadd.f32 0.0, %v678
  %680 = vmatmul.f32.gmra.mxu0 %v471
  %v681 = vpop.f32.mrf.mxu0
  %v682 = vadd.f32 0.0, %v681
  %683 = vmatmul.f32.gmra.mxu0 %v474
  %v684 = vpop.f32.mrf.mxu0
  %v685 = vadd.f32 0.0, %v684
  %686 = vmatmul.f32.gmra.mxu0 %v477
  %v687 = vpop.f32.mrf.mxu0
  %v688 = vadd.f32 0.0, %v687
  %689 = vmatmul.f32.gmra.mxu0 %v480
  %v690 = vpop.f32.mrf.mxu0
  %v691 = vadd.f32 0.0, %v690
  %692 = vmatmul.f32.gmra.mxu0 %v483
  %v693 = vpop.f32.mrf.mxu0
  %v694 = vadd.f32 0.0, %v693
  %695 = vmatmul.f32.gmra.mxu0 %v486
  %v696 = vpop.f32.mrf.mxu0
  %v697 = vadd.f32 0.0, %v696
  %698 = vmatmul.f32.gmra.mxu0 %v489
  %v699 = vpop.f32.mrf.mxu0
  %v700 = vadd.f32 0.0, %v699
  %701 = vmatmul.f32.gmra.mxu0 %v492
  %v702 = vpop.f32.mrf.mxu0
  %v703 = vadd.f32 0.0, %v702
  %704 = vmatmul.f32.gmra.mxu0 %v495
  %v705 = vpop.f32.mrf.mxu0
  %v706 = vadd.f32 0.0, %v705
  %707 = vmatmul.f32.gmra.mxu0 %v498
  %v708 = vpop.f32.mrf.mxu0
  %v709 = vadd.f32 0.0, %v708
  %710 = vmatmul.f32.gmra.mxu0 %v501
  %v711 = vpop.f32.mrf.mxu0
  %v712 = vadd.f32 0.0, %v711
  %713 = vdwg.mxu0
  %714 = vmatpush.msra.mxu0 0.0
  %715 = vmatpush.msra.mxu0 0.0
  %716 = vmatpush.msra.mxu0 0.0
  %717 = vmatpush.msra.mxu0 0.0
  %718 = vmatpush.msra.mxu0 0.0
  %719 = vmatpush.msra.mxu0 0.0
  %720 = vmatpush.msra.mxu0 0.0
  %721 = vmatpush.msra.mxu0 0.0
  %722 = vmatpush.msra.mxu0 %v648
  %723 = vmatpush.msra.mxu0 %v646
  %724 = vmatpush.msra.mxu0 %v644
  %725 = vmatpush.msra.mxu0 %v642
  %726 = vmatpush.msra.mxu0 %v640
  %727 = vmatpush.msra.mxu0 %v638
  %728 = vmatpush.msra.mxu0 %v636
  %729 = vmatpush.msra.mxu0 %v634
  %730 = vmatmul.f32.gmra.mxu0 %v456
  %v731 = vpop.f32.mrf.mxu0
  %v732 = vadd.f32 0.0, %v731
  %733 = vmatmul.f32.gmra.mxu0 %v459
  %v734 = vpop.f32.mrf.mxu0
  %v735 = vadd.f32 0.0, %v734
  %736 = vmatmul.f32.gmra.mxu0 %v462
  %v737 = vpop.f32.mrf.mxu0
  %v738 = vadd.f32 0.0, %v737
  %739 = vmatmul.f32.gmra.mxu0 %v465
  %v740 = vpop.f32.mrf.mxu0
  %v741 = vadd.f32 0.0, %v740
  %742 = vmatmul.f32.gmra.mxu0 %v468
  %v743 = vpop.f32.mrf.mxu0
  %v744 = vadd.f32 0.0, %v743
  %745 = vmatmul.f32.gmra.mxu0 %v471
  %v746 = vpop.f32.mrf.mxu0
  %v747 = vadd.f32 0.0, %v746
  %748 = vmatmul.f32.gmra.mxu0 %v474
  %v749 = vpop.f32.mrf.mxu0
  %v750 = vadd.f32 0.0, %v749
  %751 = vmatmul.f32.gmra.mxu0 %v477
  %v752 = vpop.f32.mrf.mxu0
  %v753 = vadd.f32 0.0, %v752
  %754 = vmatmul.f32.gmra.mxu0 %v480
  %v755 = vpop.f32.mrf.mxu0
  %v756 = vadd.f32 0.0, %v755
  %757 = vmatmul.f32.gmra.mxu0 %v483
  %v758 = vpop.f32.mrf.mxu0
  %v759 = vadd.f32 0.0, %v758
  %760 = vmatmul.f32.gmra.mxu0 %v486
  %v761 = vpop.f32.mrf.mxu0
  %v762 = vadd.f32 0.0, %v761
  %763 = vmatmul.f32.gmra.mxu0 %v489
  %v764 = vpop.f32.mrf.mxu0
  %v765 = vadd.f32 0.0, %v764
  %766 = vmatmul.f32.gmra.mxu0 %v492
  %v767 = vpop.f32.mrf.mxu0
  %v768 = vadd.f32 0.0, %v767
  %769 = vmatmul.f32.gmra.mxu0 %v495
  %v770 = vpop.f32.mrf.mxu0
  %v771 = vadd.f32 0.0, %v770
  %772 = vmatmul.f32.gmra.mxu0 %v498
  %v773 = vpop.f32.mrf.mxu0
  %v774 = vadd.f32 0.0, %v773
  %775 = vmatmul.f32.gmra.mxu0 %v501
  %v776 = vpop.f32.mrf.mxu0
  %v777 = vadd.f32 0.0, %v776
  %778 = vdwg.mxu0
  %v779 = vxor.u32 %v521, 2147483648
  %v780 = vxor.u32 %v586, 2147483648
  %v781 = vxor.u32 %v524, 2147483648
  %v782 = vxor.u32 %v589, 2147483648
  %v783 = vxor.u32 %v527, 2147483648
  %v784 = vxor.u32 %v592, 2147483648
  %v785 = vxor.u32 %v530, 2147483648
  %v786 = vxor.u32 %v595, 2147483648
  %v787 = vxor.u32 %v533, 2147483648
  %v788 = vxor.u32 %v598, 2147483648
  %v789 = vxor.u32 %v536, 2147483648
  %v790 = vxor.u32 %v601, 2147483648
  %v791 = vxor.u32 %v539, 2147483648
  %v792 = vxor.u32 %v604, 2147483648
  %v793 = vxor.u32 %v542, 2147483648
  %v794 = vxor.u32 %v607, 2147483648
  %v795 = vxor.u32 %v545, 2147483648
  %v796 = vxor.u32 %v610, 2147483648
  %v797 = vxor.u32 %v548, 2147483648
  %v798 = vxor.u32 %v613, 2147483648
  %v799 = vxor.u32 %v551, 2147483648
  %v800 = vxor.u32 %v616, 2147483648
  %v801 = vxor.u32 %v554, 2147483648
  %v802 = vxor.u32 %v619, 2147483648
  %v803 = vxor.u32 %v557, 2147483648
  %v804 = vxor.u32 %v622, 2147483648
  %v805 = vxor.u32 %v560, 2147483648
  %v806 = vxor.u32 %v625, 2147483648
  %v807 = vxor.u32 %v563, 2147483648
  %v808 = vxor.u32 %v628, 2147483648
  %v809 = vxor.u32 %v566, 2147483648
  %v810 = vxor.u32 %v631, 2147483648
  %v811 = vmul.f32 %v779, 1.442695
  %v812 = vpow.pop %v811
  %v813 = vmul.f32 %v780, 1.442695
  %v814 = vpow.pop %v813
  %v815 = vmul.f32 %v781, 1.442695
  %v816 = vpow.pop %v815
  %v817 = vmul.f32 %v782, 1.442695
  %v818 = vpow.pop %v817
  %v819 = vmul.f32 %v783, 1.442695
  %v820 = vpow.pop %v819
  %v821 = vmul.f32 %v784, 1.442695
  %v822 = vpow.pop %v821
  %v823 = vmul.f32 %v785, 1.442695
  %v824 = vpow.pop %v823
  %v825 = vmul.f32 %v786, 1.442695
  %v826 = vpow.pop %v825
  %v827 = vmul.f32 %v787, 1.442695
  %v828 = vpow.pop %v827
  %v829 = vmul.f32 %v788, 1.442695
  %v830 = vpow.pop %v829
  %v831 = vmul.f32 %v789, 1.442695
  %v832 = vpow.pop %v831
  %v833 = vmul.f32 %v790, 1.442695
  %v834 = vpow.pop %v833
  %v835 = vmul.f32 %v791, 1.442695
  %v836 = vpow.pop %v835
  %v837 = vmul.f32 %v792, 1.442695
  %v838 = vpow.pop %v837
  %v839 = vmul.f32 %v793, 1.442695
  %v840 = vpow.pop %v839
  %v841 = vmul.f32 %v794, 1.442695
  %v842 = vpow.pop %v841
  %v843 = vmul.f32 %v795, 1.442695
  %v844 = vpow.pop %v843
  %v845 = vmul.f32 %v796, 1.442695
  %v846 = vpow.pop %v845
  %v847 = vmul.f32 %v797, 1.442695
  %v848 = vpow.pop %v847
  %v849 = vmul.f32 %v798, 1.442695
  %v850 = vpow.pop %v849
  %v851 = vmul.f32 %v799, 1.442695
  %v852 = vpow.pop %v851
  %v853 = vmul.f32 %v800, 1.442695
  %v854 = vpow.pop %v853
  %v855 = vmul.f32 %v801, 1.442695
  %v856 = vpow.pop %v855
  %v857 = vmul.f32 %v802, 1.442695
  %v858 = vpow.pop %v857
  %v859 = vmul.f32 %v803, 1.442695
  %v860 = vpow.pop %v859
  %v861 = vmul.f32 %v804, 1.442695
  %v862 = vpow.pop %v861
  %v863 = vmul.f32 %v805, 1.442695
  %v864 = vpow.pop %v863
  %v865 = vmul.f32 %v806, 1.442695
  %v866 = vpow.pop %v865
  %v867 = vmul.f32 %v807, 1.442695
  %v868 = vpow.pop %v867
  %v869 = vmul.f32 %v808, 1.442695
  %v870 = vpow.pop %v869
  %v871 = vmul.f32 %v809, 1.442695
  %v872 = vpow.pop %v871
  %v873 = vmul.f32 %v810, 1.442695
  %v874 = vpow.pop %v873
  %v875 = vadd.f32 %v812, 1.0
  %v876 = vadd.f32 %v814, 1.0
  %v877 = vadd.f32 %v816, 1.0
  %v878 = vadd.f32 %v818, 1.0
  %v879 = vadd.f32 %v820, 1.0
  %v880 = vadd.f32 %v822, 1.0
  %v881 = vadd.f32 %v824, 1.0
  %v882 = vadd.f32 %v826, 1.0
  %v883 = vadd.f32 %v828, 1.0
  %v884 = vadd.f32 %v830, 1.0
  %v885 = vadd.f32 %v832, 1.0
  %v886 = vadd.f32 %v834, 1.0
  %v887 = vadd.f32 %v836, 1.0
  %v888 = vadd.f32 %v838, 1.0
  %v889 = vadd.f32 %v840, 1.0
  %v890 = vadd.f32 %v842, 1.0
  %v891 = vadd.f32 %v844, 1.0
  %v892 = vadd.f32 %v846, 1.0
  %v893 = vadd.f32 %v848, 1.0
  %v894 = vadd.f32 %v850, 1.0
  %v895 = vadd.f32 %v852, 1.0
  %v896 = vadd.f32 %v854, 1.0
  %v897 = vadd.f32 %v856, 1.0
  %v898 = vadd.f32 %v858, 1.0
  %v899 = vadd.f32 %v860, 1.0
  %v900 = vadd.f32 %v862, 1.0
  %v901 = vadd.f32 %v864, 1.0
  %v902 = vadd.f32 %v866, 1.0
  %v903 = vadd.f32 %v868, 1.0
  %v904 = vadd.f32 %v870, 1.0
  %v905 = vadd.f32 %v872, 1.0
  %v906 = vadd.f32 %v874, 1.0
  %v907 = vrcp.pop %v875
  %v908 = vmul.f32 %v875, %v907
  %v909 = vsub.f32 1.0, %v908
  %v910 = vmul.f32 %v907, %v909
  %v911 = vadd.f32 %v907, %v910
  %vm912 = vweird.f32 %v875
  %vm913 = vweird.f32 %v907
  %vm914 = vmor %vm912, %vm913
  %v915 = vsel %vm914, %v907, %v911
  %v916 = vand.u32 2147483647, %v875
  %vm917 = vcmp.eq.f32.partialorder %v916, 8.507059e+37
  %v918 = vand.u32 %v875, 2147483648
  %v919 = vor.u32 1.1754944e-38, %v918
  %v920 = vsel %vm917, %v919, %v915
  %v921 = vmul.f32 1.0, %v920
  %v922 = vrcp.pop %v876
  %v923 = vmul.f32 %v876, %v922
  %v924 = vsub.f32 1.0, %v923
  %v925 = vmul.f32 %v922, %v924
  %v926 = vadd.f32 %v922, %v925
  %vm927 = vweird.f32 %v876
  %vm928 = vweird.f32 %v922
  %vm929 = vmor %vm927, %vm928
  %v930 = vsel %vm929, %v922, %v926
  %v931 = vand.u32 2147483647, %v876
  %vm932 = vcmp.eq.f32.partialorder %v931, 8.507059e+37
  %v933 = vand.u32 %v876, 2147483648
  %v934 = vor.u32 1.1754944e-38, %v933
  %v935 = vsel %vm932, %v934, %v930
  %v936 = vmul.f32 1.0, %v935
  %v937 = vrcp.pop %v877
  %v938 = vmul.f32 %v877, %v937
  %v939 = vsub.f32 1.0, %v938
  %v940 = vmul.f32 %v937, %v939
  %v941 = vadd.f32 %v937, %v940
  %vm942 = vweird.f32 %v877
  %vm943 = vweird.f32 %v937
  %vm944 = vmor %vm942, %vm943
  %v945 = vsel %vm944, %v937, %v941
  %v946 = vand.u32 2147483647, %v877
  %vm947 = vcmp.eq.f32.partialorder %v946, 8.507059e+37
  %v948 = vand.u32 %v877, 2147483648
  %v949 = vor.u32 1.1754944e-38, %v948
  %v950 = vsel %vm947, %v949, %v945
  %v951 = vmul.f32 1.0, %v950
  %v952 = vrcp.pop %v878
  %v953 = vmul.f32 %v878, %v952
  %v954 = vsub.f32 1.0, %v953
  %v955 = vmul.f32 %v952, %v954
  %v956 = vadd.f32 %v952, %v955
  %vm957 = vweird.f32 %v878
  %vm958 = vweird.f32 %v952
  %vm959 = vmor %vm957, %vm958
  %v960 = vsel %vm959, %v952, %v956
  %v961 = vand.u32 2147483647, %v878
  %vm962 = vcmp.eq.f32.partialorder %v961, 8.507059e+37
  %v963 = vand.u32 %v878, 2147483648
  %v964 = vor.u32 1.1754944e-38, %v963
  %v965 = vsel %vm962, %v964, %v960
  %v966 = vmul.f32 1.0, %v965
  %v967 = vrcp.pop %v879
  %v968 = vmul.f32 %v879, %v967
  %v969 = vsub.f32 1.0, %v968
  %v970 = vmul.f32 %v967, %v969
  %v971 = vadd.f32 %v967, %v970
  %vm972 = vweird.f32 %v879
  %vm973 = vweird.f32 %v967
  %vm974 = vmor %vm972, %vm973
  %v975 = vsel %vm974, %v967, %v971
  %v976 = vand.u32 2147483647, %v879
  %vm977 = vcmp.eq.f32.partialorder %v976, 8.507059e+37
  %v978 = vand.u32 %v879, 2147483648
  %v979 = vor.u32 1.1754944e-38, %v978
  %v980 = vsel %vm977, %v979, %v975
  %v981 = vmul.f32 1.0, %v980
  %v982 = vrcp.pop %v880
  %v983 = vmul.f32 %v880, %v982
  %v984 = vsub.f32 1.0, %v983
  %v985 = vmul.f32 %v982, %v984
  %v986 = vadd.f32 %v982, %v985
  %vm987 = vweird.f32 %v880
  %vm988 = vweird.f32 %v982
  %vm989 = vmor %vm987, %vm988
  %v990 = vsel %vm989, %v982, %v986
  %v991 = vand.u32 2147483647, %v880
  %vm992 = vcmp.eq.f32.partialorder %v991, 8.507059e+37
  %v993 = vand.u32 %v880, 2147483648
  %v994 = vor.u32 1.1754944e-38, %v993
  %v995 = vsel %vm992, %v994, %v990
  %v996 = vmul.f32 1.0, %v995
  %v997 = vrcp.pop %v881
  %v998 = vmul.f32 %v881, %v997
  %v999 = vsub.f32 1.0, %v998
  %v1000 = vmul.f32 %v997, %v999
  %v1001 = vadd.f32 %v997, %v1000
  %vm1002 = vweird.f32 %v881
  %vm1003 = vweird.f32 %v997
  %vm1004 = vmor %vm1002, %vm1003
  %v1005 = vsel %vm1004, %v997, %v1001
  %v1006 = vand.u32 2147483647, %v881
  %vm1007 = vcmp.eq.f32.partialorder %v1006, 8.507059e+37
  %v1008 = vand.u32 %v881, 2147483648
  %v1009 = vor.u32 1.1754944e-38, %v1008
  %v1010 = vsel %vm1007, %v1009, %v1005
  %v1011 = vmul.f32 1.0, %v1010
  %v1012 = vrcp.pop %v882
  %v1013 = vmul.f32 %v882, %v1012
  %v1014 = vsub.f32 1.0, %v1013
  %v1015 = vmul.f32 %v1012, %v1014
  %v1016 = vadd.f32 %v1012, %v1015
  %vm1017 = vweird.f32 %v882
  %vm1018 = vweird.f32 %v1012
  %vm1019 = vmor %vm1017, %vm1018
  %v1020 = vsel %vm1019, %v1012, %v1016
  %v1021 = vand.u32 2147483647, %v882
  %vm1022 = vcmp.eq.f32.partialorder %v1021, 8.507059e+37
  %v1023 = vand.u32 %v882, 2147483648
  %v1024 = vor.u32 1.1754944e-38, %v1023
  %v1025 = vsel %vm1022, %v1024, %v1020
  %v1026 = vmul.f32 1.0, %v1025
  %v1027 = vrcp.pop %v883
  %v1028 = vmul.f32 %v883, %v1027
  %v1029 = vsub.f32 1.0, %v1028
  %v1030 = vmul.f32 %v1027, %v1029
  %v1031 = vadd.f32 %v1027, %v1030
  %vm1032 = vweird.f32 %v883
  %vm1033 = vweird.f32 %v1027
  %vm1034 = vmor %vm1032, %vm1033
  %v1035 = vsel %vm1034, %v1027, %v1031
  %v1036 = vand.u32 2147483647, %v883
  %vm1037 = vcmp.eq.f32.partialorder %v1036, 8.507059e+37
  %v1038 = vand.u32 %v883, 2147483648
  %v1039 = vor.u32 1.1754944e-38, %v1038
  %v1040 = vsel %vm1037, %v1039, %v1035
  %v1041 = vmul.f32 1.0, %v1040
  %v1042 = vrcp.pop %v884
  %v1043 = vmul.f32 %v884, %v1042
  %v1044 = vsub.f32 1.0, %v1043
  %v1045 = vmul.f32 %v1042, %v1044
  %v1046 = vadd.f32 %v1042, %v1045
  %vm1047 = vweird.f32 %v884
  %vm1048 = vweird.f32 %v1042
  %vm1049 = vmor %vm1047, %vm1048
  %v1050 = vsel %vm1049, %v1042, %v1046
  %v1051 = vand.u32 2147483647, %v884
  %vm1052 = vcmp.eq.f32.partialorder %v1051, 8.507059e+37
  %v1053 = vand.u32 %v884, 2147483648
  %v1054 = vor.u32 1.1754944e-38, %v1053
  %v1055 = vsel %vm1052, %v1054, %v1050
  %v1056 = vmul.f32 1.0, %v1055
  %v1057 = vrcp.pop %v885
  %v1058 = vmul.f32 %v885, %v1057
  %v1059 = vsub.f32 1.0, %v1058
  %v1060 = vmul.f32 %v1057, %v1059
  %v1061 = vadd.f32 %v1057, %v1060
  %vm1062 = vweird.f32 %v885
  %vm1063 = vweird.f32 %v1057
  %vm1064 = vmor %vm1062, %vm1063
  %v1065 = vsel %vm1064, %v1057, %v1061
  %v1066 = vand.u32 2147483647, %v885
  %vm1067 = vcmp.eq.f32.partialorder %v1066, 8.507059e+37
  %v1068 = vand.u32 %v885, 2147483648
  %v1069 = vor.u32 1.1754944e-38, %v1068
  %v1070 = vsel %vm1067, %v1069, %v1065
  %v1071 = vmul.f32 1.0, %v1070
  %v1072 = vrcp.pop %v886
  %v1073 = vmul.f32 %v886, %v1072
  %v1074 = vsub.f32 1.0, %v1073
  %v1075 = vmul.f32 %v1072, %v1074
  %v1076 = vadd.f32 %v1072, %v1075
  %vm1077 = vweird.f32 %v886
  %vm1078 = vweird.f32 %v1072
  %vm1079 = vmor %vm1077, %vm1078
  %v1080 = vsel %vm1079, %v1072, %v1076
  %v1081 = vand.u32 2147483647, %v886
  %vm1082 = vcmp.eq.f32.partialorder %v1081, 8.507059e+37
  %v1083 = vand.u32 %v886, 2147483648
  %v1084 = vor.u32 1.1754944e-38, %v1083
  %v1085 = vsel %vm1082, %v1084, %v1080
  %v1086 = vmul.f32 1.0, %v1085
  %v1087 = vrcp.pop %v887
  %v1088 = vmul.f32 %v887, %v1087
  %v1089 = vsub.f32 1.0, %v1088
  %v1090 = vmul.f32 %v1087, %v1089
  %v1091 = vadd.f32 %v1087, %v1090
  %vm1092 = vweird.f32 %v887
  %vm1093 = vweird.f32 %v1087
  %vm1094 = vmor %vm1092, %vm1093
  %v1095 = vsel %vm1094, %v1087, %v1091
  %v1096 = vand.u32 2147483647, %v887
  %vm1097 = vcmp.eq.f32.partialorder %v1096, 8.507059e+37
  %v1098 = vand.u32 %v887, 2147483648
  %v1099 = vor.u32 1.1754944e-38, %v1098
  %v1100 = vsel %vm1097, %v1099, %v1095
  %v1101 = vmul.f32 1.0, %v1100
  %v1102 = vrcp.pop %v888
  %v1103 = vmul.f32 %v888, %v1102
  %v1104 = vsub.f32 1.0, %v1103
  %v1105 = vmul.f32 %v1102, %v1104
  %v1106 = vadd.f32 %v1102, %v1105
  %vm1107 = vweird.f32 %v888
  %vm1108 = vweird.f32 %v1102
  %vm1109 = vmor %vm1107, %vm1108
  %v1110 = vsel %vm1109, %v1102, %v1106
  %v1111 = vand.u32 2147483647, %v888
  %vm1112 = vcmp.eq.f32.partialorder %v1111, 8.507059e+37
  %v1113 = vand.u32 %v888, 2147483648
  %v1114 = vor.u32 1.1754944e-38, %v1113
  %v1115 = vsel %vm1112, %v1114, %v1110
  %v1116 = vmul.f32 1.0, %v1115
  %v1117 = vrcp.pop %v889
  %v1118 = vmul.f32 %v889, %v1117
  %v1119 = vsub.f32 1.0, %v1118
  %v1120 = vmul.f32 %v1117, %v1119
  %v1121 = vadd.f32 %v1117, %v1120
  %vm1122 = vweird.f32 %v889
  %vm1123 = vweird.f32 %v1117
  %vm1124 = vmor %vm1122, %vm1123
  %v1125 = vsel %vm1124, %v1117, %v1121
  %v1126 = vand.u32 2147483647, %v889
  %vm1127 = vcmp.eq.f32.partialorder %v1126, 8.507059e+37
  %v1128 = vand.u32 %v889, 2147483648
  %v1129 = vor.u32 1.1754944e-38, %v1128
  %v1130 = vsel %vm1127, %v1129, %v1125
  %v1131 = vmul.f32 1.0, %v1130
  %v1132 = vrcp.pop %v890
  %v1133 = vmul.f32 %v890, %v1132
  %v1134 = vsub.f32 1.0, %v1133
  %v1135 = vmul.f32 %v1132, %v1134
  %v1136 = vadd.f32 %v1132, %v1135
  %vm1137 = vweird.f32 %v890
  %vm1138 = vweird.f32 %v1132
  %vm1139 = vmor %vm1137, %vm1138
  %v1140 = vsel %vm1139, %v1132, %v1136
  %v1141 = vand.u32 2147483647, %v890
  %vm1142 = vcmp.eq.f32.partialorder %v1141, 8.507059e+37
  %v1143 = vand.u32 %v890, 2147483648
  %v1144 = vor.u32 1.1754944e-38, %v1143
  %v1145 = vsel %vm1142, %v1144, %v1140
  %v1146 = vmul.f32 1.0, %v1145
  %v1147 = vrcp.pop %v891
  %v1148 = vmul.f32 %v891, %v1147
  %v1149 = vsub.f32 1.0, %v1148
  %v1150 = vmul.f32 %v1147, %v1149
  %v1151 = vadd.f32 %v1147, %v1150
  %vm1152 = vweird.f32 %v891
  %vm1153 = vweird.f32 %v1147
  %vm1154 = vmor %vm1152, %vm1153
  %v1155 = vsel %vm1154, %v1147, %v1151
  %v1156 = vand.u32 2147483647, %v891
  %vm1157 = vcmp.eq.f32.partialorder %v1156, 8.507059e+37
  %v1158 = vand.u32 %v891, 2147483648
  %v1159 = vor.u32 1.1754944e-38, %v1158
  %v1160 = vsel %vm1157, %v1159, %v1155
  %v1161 = vmul.f32 1.0, %v1160
  %v1162 = vrcp.pop %v892
  %v1163 = vmul.f32 %v892, %v1162
  %v1164 = vsub.f32 1.0, %v1163
  %v1165 = vmul.f32 %v1162, %v1164
  %v1166 = vadd.f32 %v1162, %v1165
  %vm1167 = vweird.f32 %v892
  %vm1168 = vweird.f32 %v1162
  %vm1169 = vmor %vm1167, %vm1168
  %v1170 = vsel %vm1169, %v1162, %v1166
  %v1171 = vand.u32 2147483647, %v892
  %vm1172 = vcmp.eq.f32.partialorder %v1171, 8.507059e+37
  %v1173 = vand.u32 %v892, 2147483648
  %v1174 = vor.u32 1.1754944e-38, %v1173
  %v1175 = vsel %vm1172, %v1174, %v1170
  %v1176 = vmul.f32 1.0, %v1175
  %v1177 = vrcp.pop %v893
  %v1178 = vmul.f32 %v893, %v1177
  %v1179 = vsub.f32 1.0, %v1178
  %v1180 = vmul.f32 %v1177, %v1179
  %v1181 = vadd.f32 %v1177, %v1180
  %vm1182 = vweird.f32 %v893
  %vm1183 = vweird.f32 %v1177
  %vm1184 = vmor %vm1182, %vm1183
  %v1185 = vsel %vm1184, %v1177, %v1181
  %v1186 = vand.u32 2147483647, %v893
  %vm1187 = vcmp.eq.f32.partialorder %v1186, 8.507059e+37
  %v1188 = vand.u32 %v893, 2147483648
  %v1189 = vor.u32 1.1754944e-38, %v1188
  %v1190 = vsel %vm1187, %v1189, %v1185
  %v1191 = vmul.f32 1.0, %v1190
  %v1192 = vrcp.pop %v894
  %v1193 = vmul.f32 %v894, %v1192
  %v1194 = vsub.f32 1.0, %v1193
  %v1195 = vmul.f32 %v1192, %v1194
  %v1196 = vadd.f32 %v1192, %v1195
  %vm1197 = vweird.f32 %v894
  %vm1198 = vweird.f32 %v1192
  %vm1199 = vmor %vm1197, %vm1198
  %v1200 = vsel %vm1199, %v1192, %v1196
  %v1201 = vand.u32 2147483647, %v894
  %vm1202 = vcmp.eq.f32.partialorder %v1201, 8.507059e+37
  %v1203 = vand.u32 %v894, 2147483648
  %v1204 = vor.u32 1.1754944e-38, %v1203
  %v1205 = vsel %vm1202, %v1204, %v1200
  %v1206 = vmul.f32 1.0, %v1205
  %v1207 = vrcp.pop %v895
  %v1208 = vmul.f32 %v895, %v1207
  %v1209 = vsub.f32 1.0, %v1208
  %v1210 = vmul.f32 %v1207, %v1209
  %v1211 = vadd.f32 %v1207, %v1210
  %vm1212 = vweird.f32 %v895
  %vm1213 = vweird.f32 %v1207
  %vm1214 = vmor %vm1212, %vm1213
  %v1215 = vsel %vm1214, %v1207, %v1211
  %v1216 = vand.u32 2147483647, %v895
  %vm1217 = vcmp.eq.f32.partialorder %v1216, 8.507059e+37
  %v1218 = vand.u32 %v895, 2147483648
  %v1219 = vor.u32 1.1754944e-38, %v1218
  %v1220 = vsel %vm1217, %v1219, %v1215
  %v1221 = vmul.f32 1.0, %v1220
  %v1222 = vrcp.pop %v896
  %v1223 = vmul.f32 %v896, %v1222
  %v1224 = vsub.f32 1.0, %v1223
  %v1225 = vmul.f32 %v1222, %v1224
  %v1226 = vadd.f32 %v1222, %v1225
  %vm1227 = vweird.f32 %v896
  %vm1228 = vweird.f32 %v1222
  %vm1229 = vmor %vm1227, %vm1228
  %v1230 = vsel %vm1229, %v1222, %v1226
  %v1231 = vand.u32 2147483647, %v896
  %vm1232 = vcmp.eq.f32.partialorder %v1231, 8.507059e+37
  %v1233 = vand.u32 %v896, 2147483648
  %v1234 = vor.u32 1.1754944e-38, %v1233
  %v1235 = vsel %vm1232, %v1234, %v1230
  %v1236 = vmul.f32 1.0, %v1235
  %v1237 = vrcp.pop %v897
  %v1238 = vmul.f32 %v897, %v1237
  %v1239 = vsub.f32 1.0, %v1238
  %v1240 = vmul.f32 %v1237, %v1239
  %v1241 = vadd.f32 %v1237, %v1240
  %vm1242 = vweird.f32 %v897
  %vm1243 = vweird.f32 %v1237
  %vm1244 = vmor %vm1242, %vm1243
  %v1245 = vsel %vm1244, %v1237, %v1241
  %v1246 = vand.u32 2147483647, %v897
  %vm1247 = vcmp.eq.f32.partialorder %v1246, 8.507059e+37
  %v1248 = vand.u32 %v897, 2147483648
  %v1249 = vor.u32 1.1754944e-38, %v1248
  %v1250 = vsel %vm1247, %v1249, %v1245
  %v1251 = vmul.f32 1.0, %v1250
  %v1252 = vrcp.pop %v898
  %v1253 = vmul.f32 %v898, %v1252
  %v1254 = vsub.f32 1.0, %v1253
  %v1255 = vmul.f32 %v1252, %v1254
  %v1256 = vadd.f32 %v1252, %v1255
  %vm1257 = vweird.f32 %v898
  %vm1258 = vweird.f32 %v1252
  %vm1259 = vmor %vm1257, %vm1258
  %v1260 = vsel %vm1259, %v1252, %v1256
  %v1261 = vand.u32 2147483647, %v898
  %vm1262 = vcmp.eq.f32.partialorder %v1261, 8.507059e+37
  %v1263 = vand.u32 %v898, 2147483648
  %v1264 = vor.u32 1.1754944e-38, %v1263
  %v1265 = vsel %vm1262, %v1264, %v1260
  %v1266 = vmul.f32 1.0, %v1265
  %v1267 = vrcp.pop %v899
  %v1268 = vmul.f32 %v899, %v1267
  %v1269 = vsub.f32 1.0, %v1268
  %v1270 = vmul.f32 %v1267, %v1269
  %v1271 = vadd.f32 %v1267, %v1270
  %vm1272 = vweird.f32 %v899
  %vm1273 = vweird.f32 %v1267
  %vm1274 = vmor %vm1272, %vm1273
  %v1275 = vsel %vm1274, %v1267, %v1271
  %v1276 = vand.u32 2147483647, %v899
  %vm1277 = vcmp.eq.f32.partialorder %v1276, 8.507059e+37
  %v1278 = vand.u32 %v899, 2147483648
  %v1279 = vor.u32 1.1754944e-38, %v1278
  %v1280 = vsel %vm1277, %v1279, %v1275
  %v1281 = vmul.f32 1.0, %v1280
  %v1282 = vrcp.pop %v900
  %v1283 = vmul.f32 %v900, %v1282
  %v1284 = vsub.f32 1.0, %v1283
  %v1285 = vmul.f32 %v1282, %v1284
  %v1286 = vadd.f32 %v1282, %v1285
  %vm1287 = vweird.f32 %v900
  %vm1288 = vweird.f32 %v1282
  %vm1289 = vmor %vm1287, %vm1288
  %v1290 = vsel %vm1289, %v1282, %v1286
  %v1291 = vand.u32 2147483647, %v900
  %vm1292 = vcmp.eq.f32.partialorder %v1291, 8.507059e+37
  %v1293 = vand.u32 %v900, 2147483648
  %v1294 = vor.u32 1.1754944e-38, %v1293
  %v1295 = vsel %vm1292, %v1294, %v1290
  %v1296 = vmul.f32 1.0, %v1295
  %v1297 = vrcp.pop %v901
  %v1298 = vmul.f32 %v901, %v1297
  %v1299 = vsub.f32 1.0, %v1298
  %v1300 = vmul.f32 %v1297, %v1299
  %v1301 = vadd.f32 %v1297, %v1300
  %vm1302 = vweird.f32 %v901
  %vm1303 = vweird.f32 %v1297
  %vm1304 = vmor %vm1302, %vm1303
  %v1305 = vsel %vm1304, %v1297, %v1301
  %v1306 = vand.u32 2147483647, %v901
  %vm1307 = vcmp.eq.f32.partialorder %v1306, 8.507059e+37
  %v1308 = vand.u32 %v901, 2147483648
  %v1309 = vor.u32 1.1754944e-38, %v1308
  %v1310 = vsel %vm1307, %v1309, %v1305
  %v1311 = vmul.f32 1.0, %v1310
  %v1312 = vrcp.pop %v902
  %v1313 = vmul.f32 %v902, %v1312
  %v1314 = vsub.f32 1.0, %v1313
  %v1315 = vmul.f32 %v1312, %v1314
  %v1316 = vadd.f32 %v1312, %v1315
  %vm1317 = vweird.f32 %v902
  %vm1318 = vweird.f32 %v1312
  %vm1319 = vmor %vm1317, %vm1318
  %v1320 = vsel %vm1319, %v1312, %v1316
  %v1321 = vand.u32 2147483647, %v902
  %vm1322 = vcmp.eq.f32.partialorder %v1321, 8.507059e+37
  %v1323 = vand.u32 %v902, 2147483648
  %v1324 = vor.u32 1.1754944e-38, %v1323
  %v1325 = vsel %vm1322, %v1324, %v1320
  %v1326 = vmul.f32 1.0, %v1325
  %v1327 = vrcp.pop %v903
  %v1328 = vmul.f32 %v903, %v1327
  %v1329 = vsub.f32 1.0, %v1328
  %v1330 = vmul.f32 %v1327, %v1329
  %v1331 = vadd.f32 %v1327, %v1330
  %vm1332 = vweird.f32 %v903
  %vm1333 = vweird.f32 %v1327
  %vm1334 = vmor %vm1332, %vm1333
  %v1335 = vsel %vm1334, %v1327, %v1331
  %v1336 = vand.u32 2147483647, %v903
  %vm1337 = vcmp.eq.f32.partialorder %v1336, 8.507059e+37
  %v1338 = vand.u32 %v903, 2147483648
  %v1339 = vor.u32 1.1754944e-38, %v1338
  %v1340 = vsel %vm1337, %v1339, %v1335
  %v1341 = vmul.f32 1.0, %v1340
  %v1342 = vrcp.pop %v904
  %v1343 = vmul.f32 %v904, %v1342
  %v1344 = vsub.f32 1.0, %v1343
  %v1345 = vmul.f32 %v1342, %v1344
  %v1346 = vadd.f32 %v1342, %v1345
  %vm1347 = vweird.f32 %v904
  %vm1348 = vweird.f32 %v1342
  %vm1349 = vmor %vm1347, %vm1348
  %v1350 = vsel %vm1349, %v1342, %v1346
  %v1351 = vand.u32 2147483647, %v904
  %vm1352 = vcmp.eq.f32.partialorder %v1351, 8.507059e+37
  %v1353 = vand.u32 %v904, 2147483648
  %v1354 = vor.u32 1.1754944e-38, %v1353
  %v1355 = vsel %vm1352, %v1354, %v1350
  %v1356 = vmul.f32 1.0, %v1355
  %v1357 = vrcp.pop %v905
  %v1358 = vmul.f32 %v905, %v1357
  %v1359 = vsub.f32 1.0, %v1358
  %v1360 = vmul.f32 %v1357, %v1359
  %v1361 = vadd.f32 %v1357, %v1360
  %vm1362 = vweird.f32 %v905
  %vm1363 = vweird.f32 %v1357
  %vm1364 = vmor %vm1362, %vm1363
  %v1365 = vsel %vm1364, %v1357, %v1361
  %v1366 = vand.u32 2147483647, %v905
  %vm1367 = vcmp.eq.f32.partialorder %v1366, 8.507059e+37
  %v1368 = vand.u32 %v905, 2147483648
  %v1369 = vor.u32 1.1754944e-38, %v1368
  %v1370 = vsel %vm1367, %v1369, %v1365
  %v1371 = vmul.f32 1.0, %v1370
  %v1372 = vrcp.pop %v906
  %v1373 = vmul.f32 %v906, %v1372
  %v1374 = vsub.f32 1.0, %v1373
  %v1375 = vmul.f32 %v1372, %v1374
  %v1376 = vadd.f32 %v1372, %v1375
  %vm1377 = vweird.f32 %v906
  %vm1378 = vweird.f32 %v1372
  %vm1379 = vmor %vm1377, %vm1378
  %v1380 = vsel %vm1379, %v1372, %v1376
  %v1381 = vand.u32 2147483647, %v906
  %vm1382 = vcmp.eq.f32.partialorder %v1381, 8.507059e+37
  %v1383 = vand.u32 %v906, 2147483648
  %v1384 = vor.u32 1.1754944e-38, %v1383
  %v1385 = vsel %vm1382, %v1384, %v1380
  %v1386 = vmul.f32 1.0, %v1385
  %v1387 = vmul.f32 %v521, %v921
  %v1388 = vmul.f32 %v586, %v936
  %v1389 = vmul.f32 %v524, %v951
  %v1390 = vmul.f32 %v589, %v966
  %v1391 = vmul.f32 %v527, %v981
  %v1392 = vmul.f32 %v592, %v996
  %v1393 = vmul.f32 %v530, %v1011
  %v1394 = vmul.f32 %v595, %v1026
  %v1395 = vmul.f32 %v533, %v1041
  %v1396 = vmul.f32 %v598, %v1056
  %v1397 = vmul.f32 %v536, %v1071
  %v1398 = vmul.f32 %v601, %v1086
  %v1399 = vmul.f32 %v539, %v1101
  %v1400 = vmul.f32 %v604, %v1116
  %v1401 = vmul.f32 %v542, %v1131
  %v1402 = vmul.f32 %v607, %v1146
  %v1403 = vmul.f32 %v545, %v1161
  %v1404 = vmul.f32 %v610, %v1176
  %v1405 = vmul.f32 %v548, %v1191
  %v1406 = vmul.f32 %v613, %v1206
  %v1407 = vmul.f32 %v551, %v1221
  %v1408 = vmul.f32 %v616, %v1236
  %v1409 = vmul.f32 %v554, %v1251
  %v1410 = vmul.f32 %v619, %v1266
  %v1411 = vmul.f32 %v557, %v1281
  %v1412 = vmul.f32 %v622, %v1296
  %v1413 = vmul.f32 %v560, %v1311
  %v1414 = vmul.f32 %v625, %v1326
  %v1415 = vmul.f32 %v563, %v1341
  %v1416 = vmul.f32 %v628, %v1356
  %v1417 = vmul.f32 %v566, %v1371
  %v1418 = vmul.f32 %v631, %v1386
  %v1419 = vmul.f32 %v1387, %v667
  %v1420 = vmul.f32 %v1388, %v732
  %v1421 = vmul.f32 %v1389, %v670
  %v1422 = vmul.f32 %v1390, %v735
  %v1423 = vmul.f32 %v1391, %v673
  %v1424 = vmul.f32 %v1392, %v738
  %v1425 = vmul.f32 %v1393, %v676
  %v1426 = vmul.f32 %v1394, %v741
  %v1427 = vmul.f32 %v1395, %v679
  %v1428 = vmul.f32 %v1396, %v744
  %v1429 = vmul.f32 %v1397, %v682
  %v1430 = vmul.f32 %v1398, %v747
  %v1431 = vmul.f32 %v1399, %v685
  %v1432 = vmul.f32 %v1400, %v750
  %v1433 = vmul.f32 %v1401, %v688
  %v1434 = vmul.f32 %v1402, %v753
  %v1435 = vmul.f32 %v1403, %v691
  %v1436 = vmul.f32 %v1404, %v756
  %v1437 = vmul.f32 %v1405, %v694
  %v1438 = vmul.f32 %v1406, %v759
  %v1439 = vmul.f32 %v1407, %v697
  %v1440 = vmul.f32 %v1408, %v762
  %v1441 = vmul.f32 %v1409, %v700
  %v1442 = vmul.f32 %v1410, %v765
  %v1443 = vmul.f32 %v1411, %v703
  %v1444 = vmul.f32 %v1412, %v768
  %v1445 = vmul.f32 %v1413, %v706
  %v1446 = vmul.f32 %v1414, %v771
  %v1447 = vmul.f32 %v1415, %v709
  %v1448 = vmul.f32 %v1416, %v774
  %v1449 = vmul.f32 %v1417, %v712
  %v1450 = vmul.f32 %v1418, %v777
  %v1451 = vld [vmem:[%s5] sm:$0xff]
  %v1452 = vld [vmem:[%s5 + $0x8] sm:$0xff]
  %v1453 = vld [vmem:[%s5 + $0x10] sm:$0xff]
  %v1454 = vld [vmem:[%s5 + $0x18] sm:$0xff]
  %v1455 = vld [vmem:[%s5 + $0x20] sm:$0xff]
  %v1456 = vld [vmem:[%s5 + $0x28] sm:$0xff]
  %v1457 = vld [vmem:[%s5 + $0x30] sm:$0xff]
  %v1458 = vld [vmem:[%s5 + $0x38] sm:$0xff]
  %v1459 = vld [vmem:[%s5 + $0x40] sm:$0xff]
  %v1460 = vld [vmem:[%s5 + $0x48] sm:$0xff]
  %v1461 = vld [vmem:[%s5 + $0x50] sm:$0xff]
  %v1462 = vld [vmem:[%s5 + $0x58] sm:$0xff]
  %v1463 = vld [vmem:[%s5 + $0x60] sm:$0xff]
  %v1464 = vld [vmem:[%s5 + $0x68] sm:$0xff]
  %v1465 = vld [vmem:[%s5 + $0x70] sm:$0xff]
  %v1466 = vld [vmem:[%s5 + $0x78] sm:$0xff]
  %v1467 = vld [vmem:[%s5 + $0x80] sm:$0xff]
  %v1468 = vld [vmem:[%s5 + $0x88] sm:$0xff]
  %v1469 = vld [vmem:[%s5 + $0x90] sm:$0xff]
  %v1470 = vld [vmem:[%s5 + $0x98] sm:$0xff]
  %v1471 = vld [vmem:[%s5 + $0xa0] sm:$0xff]
  %v1472 = vld [vmem:[%s5 + $0xa8] sm:$0xff]
  %v1473 = vld [vmem:[%s5 + $0xb0] sm:$0xff]
  %v1474 = vld [vmem:[%s5 + $0xb8] sm:$0xff]
  %v1475 = vld [vmem:[%s5 + $0xc0] sm:$0xff]
  %v1476 = vld [vmem:[%s5 + $0xc8] sm:$0xff]
  %v1477 = vld [vmem:[%s5 + $0xd0] sm:$0xff]
  %v1478 = vld [vmem:[%s5 + $0xd8] sm:$0xff]
  %v1479 = vld [vmem:[%s5 + $0xe0] sm:$0xff]
  %v1480 = vld [vmem:[%s5 + $0xe8] sm:$0xff]
  %v1481 = vld [vmem:[%s5 + $0xf0] sm:$0xff]
  %v1482 = vld [vmem:[%s5 + $0xf8] sm:$0xff]
  %1483 = vmatpush.msra.mxu0 %v1466
  %1484 = vmatpush.msra.mxu0 %v1465
  %1485 = vmatpush.msra.mxu0 %v1464
  %1486 = vmatpush.msra.mxu0 %v1463
  %1487 = vmatpush.msra.mxu0 %v1462
  %1488 = vmatpush.msra.mxu0 %v1461
  %1489 = vmatpush.msra.mxu0 %v1460
  %1490 = vmatpush.msra.mxu0 %v1459
  %1491 = vmatpush.msra.mxu0 %v1458
  %1492 = vmatpush.msra.mxu0 %v1457
  %1493 = vmatpush.msra.mxu0 %v1456
  %1494 = vmatpush.msra.mxu0 %v1455
  %1495 = vmatpush.msra.mxu0 %v1454
  %1496 = vmatpush.msra.mxu0 %v1453
  %1497 = vmatpush.msra.mxu0 %v1452
  %1498 = vmatpush.msra.mxu0 %v1451
  %1499 = vmatmul.f32.gmra.mxu0 %v1419
  %v1500 = vpop.f32.mrf.mxu0
  %v1501 = vadd.f32 0.0, %v1500
  %1502 = vmatmul.f32.gmra.mxu0 %v1421
  %v1503 = vpop.f32.mrf.mxu0
  %v1504 = vadd.f32 0.0, %v1503
  %1505 = vmatmul.f32.gmra.mxu0 %v1423
  %v1506 = vpop.f32.mrf.mxu0
  %v1507 = vadd.f32 0.0, %v1506
  %1508 = vmatmul.f32.gmra.mxu0 %v1425
  %v1509 = vpop.f32.mrf.mxu0
  %v1510 = vadd.f32 0.0, %v1509
  %1511 = vmatmul.f32.gmra.mxu0 %v1427
  %v1512 = vpop.f32.mrf.mxu0
  %v1513 = vadd.f32 0.0, %v1512
  %1514 = vmatmul.f32.gmra.mxu0 %v1429
  %v1515 = vpop.f32.mrf.mxu0
  %v1516 = vadd.f32 0.0, %v1515
  %1517 = vmatmul.f32.gmra.mxu0 %v1431
  %v1518 = vpop.f32.mrf.mxu0
  %v1519 = vadd.f32 0.0, %v1518
  %1520 = vmatmul.f32.gmra.mxu0 %v1433
  %v1521 = vpop.f32.mrf.mxu0
  %v1522 = vadd.f32 0.0, %v1521
  %1523 = vmatmul.f32.gmra.mxu0 %v1435
  %v1524 = vpop.f32.mrf.mxu0
  %v1525 = vadd.f32 0.0, %v1524
  %1526 = vmatmul.f32.gmra.mxu0 %v1437
  %v1527 = vpop.f32.mrf.mxu0
  %v1528 = vadd.f32 0.0, %v1527
  %1529 = vmatmul.f32.gmra.mxu0 %v1439
  %v1530 = vpop.f32.mrf.mxu0
  %v1531 = vadd.f32 0.0, %v1530
  %1532 = vmatmul.f32.gmra.mxu0 %v1441
  %v1533 = vpop.f32.mrf.mxu0
  %v1534 = vadd.f32 0.0, %v1533
  %1535 = vmatmul.f32.gmra.mxu0 %v1443
  %v1536 = vpop.f32.mrf.mxu0
  %v1537 = vadd.f32 0.0, %v1536
  %1538 = vmatmul.f32.gmra.mxu0 %v1445
  %v1539 = vpop.f32.mrf.mxu0
  %v1540 = vadd.f32 0.0, %v1539
  %1541 = vmatmul.f32.gmra.mxu0 %v1447
  %v1542 = vpop.f32.mrf.mxu0
  %v1543 = vadd.f32 0.0, %v1542
  %1544 = vmatmul.f32.gmra.mxu0 %v1449
  %v1545 = vpop.f32.mrf.mxu0
  %v1546 = vadd.f32 0.0, %v1545
  %1547 = vdwg.mxu0
  %1548 = vmatpush.msra.mxu0 %v1482
  %1549 = vmatpush.msra.mxu0 %v1481
  %1550 = vmatpush.msra.mxu0 %v1480
  %1551 = vmatpush.msra.mxu0 %v1479
  %1552 = vmatpush.msra.mxu0 %v1478
  %1553 = vmatpush.msra.mxu0 %v1477
  %1554 = vmatpush.msra.mxu0 %v1476
  %1555 = vmatpush.msra.mxu0 %v1475
  %1556 = vmatpush.msra.mxu0 %v1474
  %1557 = vmatpush.msra.mxu0 %v1473
  %1558 = vmatpush.msra.mxu0 %v1472
  %1559 = vmatpush.msra.mxu0 %v1471
  %1560 = vmatpush.msra.mxu0 %v1470
  %1561 = vmatpush.msra.mxu0 %v1469
  %1562 = vmatpush.msra.mxu0 %v1468
  %1563 = vmatpush.msra.mxu0 %v1467
  %1564 = vmatmul.f32.gmra.mxu0 %v1420
  %v1565 = vpop.f32.mrf.mxu0
  %v1566 = vadd.f32 %v1501, %v1565
  %1567 = vmatmul.f32.gmra.mxu0 %v1422
  %v1568 = vpop.f32.mrf.mxu0
  %v1569 = vadd.f32 %v1504, %v1568
  %1570 = vmatmul.f32.gmra.mxu0 %v1424
  %v1571 = vpop.f32.mrf.mxu0
  %v1572 = vadd.f32 %v1507, %v1571
  %1573 = vmatmul.f32.gmra.mxu0 %v1426
  %v1574 = vpop.f32.mrf.mxu0
  %v1575 = vadd.f32 %v1510, %v1574
  %1576 = vmatmul.f32.gmra.mxu0 %v1428
  %v1577 = vpop.f32.mrf.mxu0
  %v1578 = vadd.f32 %v1513, %v1577
  %1579 = vmatmul.f32.gmra.mxu0 %v1430
  %v1580 = vpop.f32.mrf.mxu0
  %v1581 = vadd.f32 %v1516, %v1580
  %1582 = vmatmul.f32.gmra.mxu0 %v1432
  %v1583 = vpop.f32.mrf.mxu0
  %v1584 = vadd.f32 %v1519, %v1583
  %1585 = vmatmul.f32.gmra.mxu0 %v1434
  %v1586 = vpop.f32.mrf.mxu0
  %v1587 = vadd.f32 %v1522, %v1586
  %1588 = vmatmul.f32.gmra.mxu0 %v1436
  %v1589 = vpop.f32.mrf.mxu0
  %v1590 = vadd.f32 %v1525, %v1589
  %1591 = vmatmul.f32.gmra.mxu0 %v1438
  %v1592 = vpop.f32.mrf.mxu0
  %v1593 = vadd.f32 %v1528, %v1592
  %1594 = vmatmul.f32.gmra.mxu0 %v1440
  %v1595 = vpop.f32.mrf.mxu0
  %v1596 = vadd.f32 %v1531, %v1595
  %1597 = vmatmul.f32.gmra.mxu0 %v1442
  %v1598 = vpop.f32.mrf.mxu0
  %v1599 = vadd.f32 %v1534, %v1598
  %1600 = vmatmul.f32.gmra.mxu0 %v1444
  %v1601 = vpop.f32.mrf.mxu0
  %v1602 = vadd.f32 %v1537, %v1601
  %1603 = vmatmul.f32.gmra.mxu0 %v1446
  %v1604 = vpop.f32.mrf.mxu0
  %v1605 = vadd.f32 %v1540, %v1604
  %1606 = vmatmul.f32.gmra.mxu0 %v1448
  %v1607 = vpop.f32.mrf.mxu0
  %v1608 = vadd.f32 %v1543, %v1607
  %1609 = vmatmul.f32.gmra.mxu0 %v1450
  %v1610 = vpop.f32.mrf.mxu0
  %v1611 = vadd.f32 %v1546, %v1610
  %1612 = vdwg.mxu0
  %v1613 = vadd.f32 %v23, %v1566
  %v1614 = vadd.f32 %v24, %v1569
  %v1615 = vadd.f32 %v25, %v1572
  %v1616 = vadd.f32 %v26, %v1575
  %v1617 = vadd.f32 %v27, %v1578
  %v1618 = vadd.f32 %v28, %v1581
  %v1619 = vadd.f32 %v29, %v1584
  %v1620 = vadd.f32 %v30, %v1587
  %v1621 = vadd.f32 %v31, %v1590
  %v1622 = vadd.f32 %v32, %v1593
  %v1623 = vadd.f32 %v33, %v1596
  %v1624 = vadd.f32 %v34, %v1599
  %v1625 = vadd.f32 %v35, %v1602
  %v1626 = vadd.f32 %v36, %v1605
  %v1627 = vadd.f32 %v37, %v1608
  %v1628 = vadd.f32 %v38, %v1611
  %1629 = vst.msk [vmem:[%s6] sm:$0xff] %vm39, %v1613
  %1630 = vst.msk [vmem:[%s6 + $0x8] sm:$0xff] %vm39, %v1614
  %1631 = vst.msk [vmem:[%s6 + $0x10] sm:$0xff] %vm39, %v1615
  %1632 = vst.msk [vmem:[%s6 + $0x18] sm:$0xff] %vm39, %v1616
  %1633 = vst.msk [vmem:[%s6 + $0x20] sm:$0xff] %vm39, %v1617
  %1634 = vst.msk [vmem:[%s6 + $0x28] sm:$0xff] %vm39, %v1618
  %1635 = vst.msk [vmem:[%s6 + $0x30] sm:$0xff] %vm39, %v1619
  %1636 = vst.msk [vmem:[%s6 + $0x38] sm:$0xff] %vm39, %v1620
  %1637 = vst.msk [vmem:[%s6 + $0x40] sm:$0xff] %vm39, %v1621
  %1638 = vst.msk [vmem:[%s6 + $0x48] sm:$0xff] %vm39, %v1622
  %1639 = vst.msk [vmem:[%s6 + $0x50] sm:$0xff] %vm39, %v1623
  %1640 = vst.msk [vmem:[%s6 + $0x58] sm:$0xff] %vm39, %v1624
  %1641 = vst.msk [vmem:[%s6 + $0x60] sm:$0xff] %vm39, %v1625
  %1642 = vst.msk [vmem:[%s6 + $0x68] sm:$0xff] %vm39, %v1626
  %1643 = vst.msk [vmem:[%s6 + $0x70] sm:$0xff] %vm39, %v1627
  %1644 = vst.msk [vmem:[%s6 + $0x78] sm:$0xff] %vm39, %v1628
  // Predicated region
  $region26: #{tpu_custom_call.1} parent=0 // pred_check
    _
  $region27: #{tpu_custom_call.1} parent=0 // pred_check_branch
    %1646 = sbr.rel (0) target = $region29
  $region28: #{tpu_custom_call.1} parent=0 // pred_region
    _
  $region29: #{tpu_custom_call.1} parent=0 // pred_fallthru
    _
  // Predicated region
  $region30: #{tpu_custom_call.1} parent=0 // pred_check
    _
  $region31: #{tpu_custom_call.1} parent=0 // pred_check_branch
    %1648 = sbr.rel (0) target = $region33
  $region32: #{tpu_custom_call.1} parent=0 // pred_region
    _
  $region33: #{tpu_custom_call.1} parent=0 // pred_fallthru
    _

</llo_original>
